<compile_context>
chip_gen: v6e
topology: v6e:2x2x1
jax: 0.10.0
libtpu: 0.0.40
codegen_flags: <defaults>
</compile_context>

<pallas_src>
import jax
import jax.numpy as jnp
from jax import lax
from jax.experimental import pallas as pl
from jax.experimental.pallas import tpu as pltpu

HIDDEN_SIZE = 10
INPUT_SIZE = 33
NUM_CLASSES = 1
NUM_LAYERS = 1
FC1_DIM = 128
GP = 128                 # per-gate lane pitch (one full vreg lane width)
GP4 = 4 * GP             # packed gate axis, gate order [i|f|g|o] (PyTorch order)
OUT_PAD = 128            # lane-dense padded output width (>= NUM_CLASSES)


def _lstm1_kernel(x_ref,        # (TILE_B, T, I) batch-first block
                  wx_ref,       # (I, GP4)   gate-aligned input->gate weights
                  wh_ref,       # (GP, GP4)  gate-aligned hidden->gate weights (rows >= H zero)
                  b_ref,        # (1, GP4)   gate-aligned bias (b_ih + b_hh)
                  w1_ref,       # (GP, FC1_DIM)   rows >= H zero
                  b1_ref,       # (1, FC1_DIM)
                  w2_ref,       # (FC1_DIM, OUT_PAD)  cols >= NUM_CLASSES zero
                  b2_ref,       # (1, OUT_PAD)
                  out_ref,      # (TILE_B, OUT_PAD)
                  xproj_ref):   # VMEM scratch (TILE_B, T, GP4)
    tb, T, nin = x_ref.shape

    wh = wh_ref[...]   # (GP, GP4), stays live across the (unrolled) time loop

    # ---- Hoisted input projection: one (TILE_B*T, I) @ (I, GP4) matmul + ONE bias
    #      broadcast for the whole sequence, parked in a VMEM scratch so the per-step
    #      read is a plain load rather than a cross-sublane extract of a vreg value.
    #      NOTE: the reshape is layout-free only when T % 8 == 0 (sublane tile); for
    #      other T Mosaic inserts a one-time relayout copy (correct, just not free).
    x2d = x_ref[...].reshape(tb * T, nin)
    xproj = jnp.dot(x2d, wx_ref[...], preferred_element_type=jnp.float32) + b_ref[...]
    xproj_ref[...] = xproj.reshape(tb, T, GP4)

    # h/c carried at full 128-lane chunk width. Padding lanes (>= H within each chunk)
    # stay exactly 0 by construction: zero weight columns & bias -> pre = 0 there ->
    # i=f=o=0.5, g=tanh(0)=0 -> c_pad = 0.5*0 + 0.5*0 = 0, h_pad = 0.5*tanh(0) = 0.
    h = jnp.zeros((tb, GP), jnp.float32)
    c = jnp.zeros((tb, GP), jnp.float32)

    # ---- Recurrence, fully unrolled (T static & small). Per step: one packed
    #      (TILE_B,128)@(128,512) matmul + 1 sigmoid + 2 tanh; gate picks are
    #      whole-vreg (128-lane aligned) selections, no XLU rotates on the chain.
    # TODO(synk): if this stays MXU-round-trip bound on v5e/v6e, swap the per-step dot
    # for a VPU broadcast-FMA over the H=10 rows of wh (stride-0 sublane reads) and
    # measure per generation (v7x's MRB already cheapens the result pop).
    # TODO(synk): if T grows, switch to lax.fori_loop(..., unroll=True) to bound vreg
    # live ranges instead of full Python unrolling.
    for t in range(T):
        xpt = xproj_ref[:, t, :]                                         # (TILE_B, GP4)
        pre = xpt + jnp.dot(h, wh, preferred_element_type=jnp.float32)   # (TILE_B, GP4)
        sig = jax.nn.sigmoid(pre)          # single EUP pass covering i, f, o chunks
        i_g = sig[:, 0 * GP:1 * GP]
        f_g = sig[:, 1 * GP:2 * GP]
        o_g = sig[:, 3 * GP:4 * GP]
        g_g = jnp.tanh(pre[:, 2 * GP:3 * GP])
        c = f_g * c + i_g * g_g
        h = o_g * jnp.tanh(c)

    # ---- MLP head: relu(hn) -> fc_1 -> relu -> fc (lane-dense padded output). ----
    # TODO(synk): fc2 has only 1 real output column of 128; a VPU multiply + lane
    # reduce would drop the w2 MXU pass, but keep MXU form until XLU budget is profiled.
    hn = jnp.maximum(h, 0.0)
    z = jnp.maximum(
        jnp.dot(hn, w1_ref[...], preferred_element_type=jnp.float32) + b1_ref[...], 0.0)
    out = jnp.dot(z, w2_ref[...], preferred_element_type=jnp.float32) + b2_ref[...]
    out_ref[...] = out.astype(out_ref.dtype)


def _pick_batch_tile(batch):
    """Largest batch tile in {256,...,8} dividing `batch`, else the whole batch.

    256 keeps double-buffered x/out tiles plus the (TILE_B, T, 4*128) f32 scratch a few
    MiB, comfortably inside v7x's 32 MiB scoped / 64 MiB physical VMEM.
    """
    if batch % 8 != 0:
        return batch
    for cand in (256, 128, 64, 32, 16, 8):
        if batch % cand == 0:
            return cand
    return batch


@jax.jit
def lstm1_forward(x, params):
    """x: (B, T, I) float32, batch_first exactly like the PyTorch module."""
    B, T, I = x.shape
    tile_b = _pick_batch_tile(B)
    grid = (B // tile_b,)

    def weight_spec(shape):
        return pl.BlockSpec(shape, lambda i: (0, 0))   # VMEM-resident across grid steps

    grid_spec = pltpu.PrefetchScalarGridSpec(
        num_scalar_prefetch=0,
        grid=grid,
        in_specs=[
            pl.BlockSpec((tile_b, T, I), lambda i: (i, 0, 0)),
            weight_spec((I, GP4)),
            weight_spec((GP, GP4)),
            weight_spec((1, GP4)),
            weight_spec((GP, FC1_DIM)),
            weight_spec((1, FC1_DIM)),
            weight_spec((FC1_DIM, OUT_PAD)),
            weight_spec((1, OUT_PAD)),
        ],
        out_specs=pl.BlockSpec((tile_b, OUT_PAD), lambda i: (i, 0)),
        scratch_shapes=[pltpu.VMEM((tile_b, T, GP4), jnp.float32)],
    )
    # TODO(synk): for production batches on v6e/v7x, feed bf16 x / packed weights
    # (keep preferred_element_type=f32) to halve the x DMA bytes; noise at B=2.
    out_pad = pl.pallas_call(
        _lstm1_kernel,
        out_shape=jax.ShapeDtypeStruct((B, OUT_PAD), jnp.float32),
        grid_spec=grid_spec,
        compiler_params=pltpu.CompilerParams(
            dimension_semantics=("parallel",),
            vmem_limit_bytes=32 * 1024 * 1024,
        ),
    )(x, params["wxp"], params["whp"], params["bp"],
      params["w1p"], params["b1"], params["w2p"], params["b2p"])
    return out_pad[:, :NUM_CLASSES]


def make_params(key):
    """Deterministic parameter init mirroring the PyTorch module's shapes.

    Produces both the plain transposed weights (for the pure-JAX reference) and the
    gate-aligned / zero-padded packings used by the kernel: gate g occupies lanes
    [g*128, g*128 + H) of the 512-wide packed gate axis; wh/w1 rows beyond H and
    w2/b2 columns beyond NUM_CLASSES are zero so padded lanes stay exact zeros.
    """
    ks = jax.random.split(key, 8)
    H, I = HIDDEN_SIZE, INPUT_SIZE
    bound = 1.0 / (H ** 0.5)
    w_ih = jax.random.uniform(ks[0], (4 * H, I), jnp.float32, -bound, bound)
    w_hh = jax.random.uniform(ks[1], (4 * H, H), jnp.float32, -bound, bound)
    b_ih = jax.random.uniform(ks[2], (4 * H,), jnp.float32, -bound, bound)
    b_hh = jax.random.uniform(ks[3], (4 * H,), jnp.float32, -bound, bound)

    w1 = jax.random.uniform(ks[4], (FC1_DIM, H), jnp.float32, -bound, bound)
    b1 = jax.random.uniform(ks[5], (FC1_DIM,), jnp.float32, -bound, bound)
    bound2 = 1.0 / (FC1_DIM ** 0.5)
    w2 = jax.random.uniform(ks[6], (NUM_CLASSES, FC1_DIM), jnp.float32, -bound2, bound2)
    b2 = jax.random.uniform(ks[7], (NUM_CLASSES,), jnp.float32, -bound2, bound2)

    # (fan_in, fan_out) layouts, gate order [i|f|g|o] — used by the pure-JAX reference.
    wx = jnp.transpose(w_ih)                  # (I, 4H)
    wh = jnp.transpose(w_hh)                  # (H, 4H)
    b = (b_ih + b_hh).reshape(1, 4 * H)       # (1, 4H)
    w1_t = jnp.transpose(w1)                  # (H, 128)
    b1_r = b1.reshape(1, FC1_DIM)
    w2_t = jnp.transpose(w2)                  # (128, NUM_CLASSES)
    b2_r = b2.reshape(1, NUM_CLASSES)

    # Gate-aligned packing for the kernel.
    wxp = jnp.zeros((I, GP4), jnp.float32)
    whp = jnp.zeros((GP, GP4), jnp.float32)
    bp = jnp.zeros((1, GP4), jnp.float32)
    for g in range(4):
        wxp = wxp.at[:, g * GP:g * GP + H].set(wx[:, g * H:(g + 1) * H])
        whp = whp.at[:H, g * GP:g * GP + H].set(wh[:, g * H:(g + 1) * H])
        bp = bp.at[:, g * GP:g * GP + H].set(b[:, g * H:(g + 1) * H])

    w1p = jnp.zeros((GP, FC1_DIM), jnp.float32).at[:H, :].set(w1_t)
    w2p = jnp.zeros((FC1_DIM, OUT_PAD), jnp.float32).at[:, :NUM_CLASSES].set(w2_t)
    b2p = jnp.zeros((1, OUT_PAD), jnp.float32).at[:, :NUM_CLASSES].set(b2_r)

    return dict(
        # kernel (packed / padded)
        wxp=wxp, whp=whp, bp=bp, w1p=w1p, b1=b1_r, w2p=w2p, b2p=b2p,
        # reference (unpacked)
        wx=wx, wh=wh, b=b, w1=w1_t, w2=w2_t, b2=b2_r,
    )


def lstm1_reference(x, p):
    """Pure-JAX reference of the same forward pass (for correctness check)."""
    B = x.shape[0]
    H = HIDDEN_SIZE
    h = jnp.zeros((B, H), jnp.float32)
    c = jnp.zeros((B, H), jnp.float32)

    def step(carry, x_t):
        h, c = carry
        pre = x_t @ p["wx"] + h @ p["wh"] + p["b"]        # (B, 4H), gates [i|f|g|o]
        i = jax.nn.sigmoid(pre[:, 0 * H:1 * H])
        f = jax.nn.sigmoid(pre[:, 1 * H:2 * H])
        g = jnp.tanh(pre[:, 2 * H:3 * H])
        o = jax.nn.sigmoid(pre[:, 3 * H:4 * H])
        c = f * c + i * g
        h = o * jnp.tanh(c)
        return (h, c), None

    (h, _), _ = lax.scan(step, (h, c), jnp.transpose(x, (1, 0, 2)))
    z = jnp.maximum(jnp.maximum(h, 0.0) @ p["w1"] + p["b1"], 0.0)
    return z @ p["w2"] + p["b2"]


if __name__ == "__main__":
    key = jax.random.PRNGKey(0)
    k_x, k_p = jax.random.split(key)

    batch, seq_len = 2, 8
    x = jax.random.normal(k_x, (batch, seq_len, INPUT_SIZE), jnp.float32)
    params = make_params(k_p)

    out = jax.block_until_ready(lstm1_forward(x, params))
    ref = lstm1_reference(x, params)

    assert out.shape == (batch, NUM_CLASSES), out.shape
    assert jnp.allclose(out, ref, atol=2e-5, rtol=1e-5), (out, ref)

    print("KERNEL_OK")
</pallas_src>

<mosaic_0001>
module attributes {stable_mosaic.version = 11 : i64} {
  func.func @_lstm1_kernel(%arg0: i32, %arg1: memref<2x8x33xf32, #tpu.memory_space<vmem>>, %arg2: memref<33x512xf32, #tpu.memory_space<vmem>>, %arg3: memref<128x512xf32, #tpu.memory_space<vmem>>, %arg4: memref<1x512xf32, #tpu.memory_space<vmem>>, %arg5: memref<128x128xf32, #tpu.memory_space<vmem>>, %arg6: memref<1x128xf32, #tpu.memory_space<vmem>>, %arg7: memref<128x128xf32, #tpu.memory_space<vmem>>, %arg8: memref<1x128xf32, #tpu.memory_space<vmem>>, %arg9: memref<2x128xf32, #tpu.memory_space<vmem>>, %arg10: memref<2x8x512xf32, #tpu.memory_space<vmem>>) attributes {dimension_semantics = [#tpu.dimension_semantics<parallel>], iteration_bounds = array<i64: 1>, scalar_prefetch = 0 : i64, scratch_operands = 1 : i64, tpu.core_type = #tpu.core_type<tc>, window_params = [{transform_indices = @transform_0, window_bounds = array<i64: 2, 8, 33>}, {pipeline_mode = #tpu.pipeline_mode<synchronous>, transform_indices = @transform_1, window_bounds = array<i64: 33, 512>}, {pipeline_mode = #tpu.pipeline_mode<synchronous>, transform_indices = @transform_2, window_bounds = array<i64: 128, 512>}, {pipeline_mode = #tpu.pipeline_mode<synchronous>, transform_indices = @transform_3, window_bounds = array<i64: 1, 512>}, {pipeline_mode = #tpu.pipeline_mode<synchronous>, transform_indices = @transform_4, window_bounds = array<i64: 128, 128>}, {pipeline_mode = #tpu.pipeline_mode<synchronous>, transform_indices = @transform_5, window_bounds = array<i64: 1, 128>}, {pipeline_mode = #tpu.pipeline_mode<synchronous>, transform_indices = @transform_6, window_bounds = array<i64: 128, 128>}, {pipeline_mode = #tpu.pipeline_mode<synchronous>, transform_indices = @transform_7, window_bounds = array<i64: 1, 128>}, {transform_indices = @transform_8, window_bounds = array<i64: 2, 128>}]} {
    %c0 = arith.constant 0 : index
    %c0_0 = arith.constant 0 : index
    %0 = vector.load %arg3[%c0, %c0_0] : memref<128x512xf32, #tpu.memory_space<vmem>>, vector<128x512xf32>
    %c0_1 = arith.constant 0 : index
    %c0_2 = arith.constant 0 : index
    %c0_3 = arith.constant 0 : index
    %1 = vector.load %arg1[%c0_1, %c0_2, %c0_3] : memref<2x8x33xf32, #tpu.memory_space<vmem>>, vector<2x8x33xf32>
    %2 = vector.shape_cast %1 : vector<2x8x33xf32> to vector<16x33xf32>
    %c0_4 = arith.constant 0 : index
    %c0_5 = arith.constant 0 : index
    %3 = vector.load %arg2[%c0_4, %c0_5] : memref<33x512xf32, #tpu.memory_space<vmem>>, vector<33x512xf32>
    %cst = arith.constant dense<0.000000e+00> : vector<16x512xf32>
    %4 = tpu.matmul %2, %3, %cst {dimension_numbers = #tpu.dot_dimension_numbers<[1], [0], [0], [1], [0, 0, 1, 1], [], []>} : vector<16x33xf32>, vector<33x512xf32>, vector<16x512xf32> -> vector<16x512xf32>
    %c0_6 = arith.constant 0 : index
    %c0_7 = arith.constant 0 : index
    %5 = vector.load %arg4[%c0_6, %c0_7] : memref<1x512xf32, #tpu.memory_space<vmem>>, vector<1x512xf32>
    %6 = vector.broadcast %5 : vector<1x512xf32> to vector<16x512xf32>
    %7 = arith.addf %4, %6 : vector<16x512xf32>
    %8 = vector.shape_cast %7 : vector<16x512xf32> to vector<2x8x512xf32>
    %c0_8 = arith.constant 0 : index
    %c0_9 = arith.constant 0 : index
    %c0_10 = arith.constant 0 : index
    %9 = vector.load %arg10[%c0_8, %c0_9, %c0_10] : memref<2x8x512xf32, #tpu.memory_space<vmem>>, vector<2x8x512xf32>
    tpu.vector_store %arg10[%c0_8, %c0_9, %c0_10], %8 {strides = array<i32>} : memref<2x8x512xf32, #tpu.memory_space<vmem>>, vector<2x8x512xf32>,
    %cst_11 = arith.constant 0.000000e+00 : f32
    %10 = vector.broadcast %cst_11 : f32 to vector<2x128xf32>
    %cst_12 = arith.constant 0.000000e+00 : f32
    %11 = vector.broadcast %cst_12 : f32 to vector<2x128xf32>
    %c0_13 = arith.constant 0 : index
    %c0_14 = arith.constant 0 : index
    %c0_15 = arith.constant 0 : index
    %12 = vector.load %arg10[%c0_13, %c0_14, %c0_15] : memref<2x8x512xf32, #tpu.memory_space<vmem>>, vector<2x1x512xf32>
    %13 = vector.shape_cast %12 : vector<2x1x512xf32> to vector<2x512xf32>
    %cst_16 = arith.constant dense<0.000000e+00> : vector<2x512xf32>
    %14 = tpu.matmul %10, %0, %cst_16 {dimension_numbers = #tpu.dot_dimension_numbers<[1], [0], [0], [1], [0, 0, 1, 1], [], []>} : vector<2x128xf32>, vector<128x512xf32>, vector<2x512xf32> -> vector<2x512xf32>
    %15 = arith.addf %13, %14 : vector<2x512xf32>
    %16 = arith.negf %15 : vector<2x512xf32>
    %17 = math.exp %16 : vector<2x512xf32>
    %cst_17 = arith.constant 1.000000e+00 : f32
    %18 = vector.broadcast %cst_17 : f32 to vector<2x512xf32>
    %19 = arith.addf %18, %17 : vector<2x512xf32>
    %20 = arith.divf %18, %19 : vector<2x512xf32>
    %21 = vector.extract_strided_slice %20 {offsets = [0, 0], sizes = [2, 128], strides = [1, 1]} : vector<2x512xf32> to vector<2x128xf32>
    %22 = vector.extract_strided_slice %20 {offsets = [0, 128], sizes = [2, 128], strides = [1, 1]} : vector<2x512xf32> to vector<2x128xf32>
    %23 = vector.extract_strided_slice %20 {offsets = [0, 384], sizes = [2, 128], strides = [1, 1]} : vector<2x512xf32> to vector<2x128xf32>
    %24 = vector.extract_strided_slice %15 {offsets = [0, 256], sizes = [2, 128], strides = [1, 1]} : vector<2x512xf32> to vector<2x128xf32>
    %25 = math.tanh %24 : vector<2x128xf32>
    %26 = arith.mulf %22, %11 : vector<2x128xf32>
    %27 = arith.mulf %21, %25 : vector<2x128xf32>
    %28 = arith.addf %26, %27 : vector<2x128xf32>
    %29 = math.tanh %28 : vector<2x128xf32>
    %30 = arith.mulf %23, %29 : vector<2x128xf32>
    %c0_18 = arith.constant 0 : index
    %c1 = arith.constant 1 : index
    %c0_19 = arith.constant 0 : index
    %31 = vector.load %arg10[%c0_18, %c1, %c0_19] : memref<2x8x512xf32, #tpu.memory_space<vmem>>, vector<2x1x512xf32>
    %32 = vector.shape_cast %31 : vector<2x1x512xf32> to vector<2x512xf32>
    %cst_20 = arith.constant dense<0.000000e+00> : vector<2x512xf32>
    %33 = tpu.matmul %30, %0, %cst_20 {dimension_numbers = #tpu.dot_dimension_numbers<[1], [0], [0], [1], [0, 0, 1, 1], [], []>} : vector<2x128xf32>, vector<128x512xf32>, vector<2x512xf32> -> vector<2x512xf32>
    %34 = arith.addf %32, %33 : vector<2x512xf32>
    %35 = arith.negf %34 : vector<2x512xf32>
    %36 = math.exp %35 : vector<2x512xf32>
    %cst_21 = arith.constant 1.000000e+00 : f32
    %37 = vector.broadcast %cst_21 : f32 to vector<2x512xf32>
    %38 = arith.addf %37, %36 : vector<2x512xf32>
    %39 = arith.divf %37, %38 : vector<2x512xf32>
    %40 = vector.extract_strided_slice %39 {offsets = [0, 0], sizes = [2, 128], strides = [1, 1]} : vector<2x512xf32> to vector<2x128xf32>
    %41 = vector.extract_strided_slice %39 {offsets = [0, 128], sizes = [2, 128], strides = [1, 1]} : vector<2x512xf32> to vector<2x128xf32>
    %42 = vector.extract_strided_slice %39 {offsets = [0, 384], sizes = [2, 128], strides = [1, 1]} : vector<2x512xf32> to vector<2x128xf32>
    %43 = vector.extract_strided_slice %34 {offsets = [0, 256], sizes = [2, 128], strides = [1, 1]} : vector<2x512xf32> to vector<2x128xf32>
    %44 = math.tanh %43 : vector<2x128xf32>
    %45 = arith.mulf %41, %28 : vector<2x128xf32>
    %46 = arith.mulf %40, %44 : vector<2x128xf32>
    %47 = arith.addf %45, %46 : vector<2x128xf32>
    %48 = math.tanh %47 : vector<2x128xf32>
    %49 = arith.mulf %42, %48 : vector<2x128xf32>
    %c0_22 = arith.constant 0 : index
    %c2 = arith.constant 2 : index
    %c0_23 = arith.constant 0 : index
    %50 = vector.load %arg10[%c0_22, %c2, %c0_23] : memref<2x8x512xf32, #tpu.memory_space<vmem>>, vector<2x1x512xf32>
    %51 = vector.shape_cast %50 : vector<2x1x512xf32> to vector<2x512xf32>
    %cst_24 = arith.constant dense<0.000000e+00> : vector<2x512xf32>
    %52 = tpu.matmul %49, %0, %cst_24 {dimension_numbers = #tpu.dot_dimension_numbers<[1], [0], [0], [1], [0, 0, 1, 1], [], []>} : vector<2x128xf32>, vector<128x512xf32>, vector<2x512xf32> -> vector<2x512xf32>
    %53 = arith.addf %51, %52 : vector<2x512xf32>
    %54 = arith.negf %53 : vector<2x512xf32>
    %55 = math.exp %54 : vector<2x512xf32>
    %cst_25 = arith.constant 1.000000e+00 : f32
    %56 = vector.broadcast %cst_25 : f32 to vector<2x512xf32>
    %57 = arith.addf %56, %55 : vector<2x512xf32>
    %58 = arith.divf %56, %57 : vector<2x512xf32>
    %59 = vector.extract_strided_slice %58 {offsets = [0, 0], sizes = [2, 128], strides = [1, 1]} : vector<2x512xf32> to vector<2x128xf32>
    %60 = vector.extract_strided_slice %58 {offsets = [0, 128], sizes = [2, 128], strides = [1, 1]} : vector<2x512xf32> to vector<2x128xf32>
    %61 = vector.extract_strided_slice %58 {offsets = [0, 384], sizes = [2, 128], strides = [1, 1]} : vector<2x512xf32> to vector<2x128xf32>
    %62 = vector.extract_strided_slice %53 {offsets = [0, 256], sizes = [2, 128], strides = [1, 1]} : vector<2x512xf32> to vector<2x128xf32>
    %63 = math.tanh %62 : vector<2x128xf32>
    %64 = arith.mulf %60, %47 : vector<2x128xf32>
    %65 = arith.mulf %59, %63 : vector<2x128xf32>
    %66 = arith.addf %64, %65 : vector<2x128xf32>
    %67 = math.tanh %66 : vector<2x128xf32>
    %68 = arith.mulf %61, %67 : vector<2x128xf32>
    %c0_26 = arith.constant 0 : index
    %c3 = arith.constant 3 : index
    %c0_27 = arith.constant 0 : index
    %69 = vector.load %arg10[%c0_26, %c3, %c0_27] : memref<2x8x512xf32, #tpu.memory_space<vmem>>, vector<2x1x512xf32>
    %70 = vector.shape_cast %69 : vector<2x1x512xf32> to vector<2x512xf32>
    %cst_28 = arith.constant dense<0.000000e+00> : vector<2x512xf32>
    %71 = tpu.matmul %68, %0, %cst_28 {dimension_numbers = #tpu.dot_dimension_numbers<[1], [0], [0], [1], [0, 0, 1, 1], [], []>} : vector<2x128xf32>, vector<128x512xf32>, vector<2x512xf32> -> vector<2x512xf32>
    %72 = arith.addf %70, %71 : vector<2x512xf32>
    %73 = arith.negf %72 : vector<2x512xf32>
    %74 = math.exp %73 : vector<2x512xf32>
    %cst_29 = arith.constant 1.000000e+00 : f32
    %75 = vector.broadcast %cst_29 : f32 to vector<2x512xf32>
    %76 = arith.addf %75, %74 : vector<2x512xf32>
    %77 = arith.divf %75, %76 : vector<2x512xf32>
    %78 = vector.extract_strided_slice %77 {offsets = [0, 0], sizes = [2, 128], strides = [1, 1]} : vector<2x512xf32> to vector<2x128xf32>
    %79 = vector.extract_strided_slice %77 {offsets = [0, 128], sizes = [2, 128], strides = [1, 1]} : vector<2x512xf32> to vector<2x128xf32>
    %80 = vector.extract_strided_slice %77 {offsets = [0, 384], sizes = [2, 128], strides = [1, 1]} : vector<2x512xf32> to vector<2x128xf32>
    %81 = vector.extract_strided_slice %72 {offsets = [0, 256], sizes = [2, 128], strides = [1, 1]} : vector<2x512xf32> to vector<2x128xf32>
    %82 = math.tanh %81 : vector<2x128xf32>
    %83 = arith.mulf %79, %66 : vector<2x128xf32>
    %84 = arith.mulf %78, %82 : vector<2x128xf32>
    %85 = arith.addf %83, %84 : vector<2x128xf32>
    %86 = math.tanh %85 : vector<2x128xf32>
    %87 = arith.mulf %80, %86 : vector<2x128xf32>
    %c0_30 = arith.constant 0 : index
    %c4 = arith.constant 4 : index
    %c0_31 = arith.constant 0 : index
    %88 = vector.load %arg10[%c0_30, %c4, %c0_31] : memref<2x8x512xf32, #tpu.memory_space<vmem>>, vector<2x1x512xf32>
    %89 = vector.shape_cast %88 : vector<2x1x512xf32> to vector<2x512xf32>
    %cst_32 = arith.constant dense<0.000000e+00> : vector<2x512xf32>
    %90 = tpu.matmul %87, %0, %cst_32 {dimension_numbers = #tpu.dot_dimension_numbers<[1], [0], [0], [1], [0, 0, 1, 1], [], []>} : vector<2x128xf32>, vector<128x512xf32>, vector<2x512xf32> -> vector<2x512xf32>
    %91 = arith.addf %89, %90 : vector<2x512xf32>
    %92 = arith.negf %91 : vector<2x512xf32>
    %93 = math.exp %92 : vector<2x512xf32>
    %cst_33 = arith.constant 1.000000e+00 : f32
    %94 = vector.broadcast %cst_33 : f32 to vector<2x512xf32>
    %95 = arith.addf %94, %93 : vector<2x512xf32>
    %96 = arith.divf %94, %95 : vector<2x512xf32>
    %97 = vector.extract_strided_slice %96 {offsets = [0, 0], sizes = [2, 128], strides = [1, 1]} : vector<2x512xf32> to vector<2x128xf32>
    %98 = vector.extract_strided_slice %96 {offsets = [0, 128], sizes = [2, 128], strides = [1, 1]} : vector<2x512xf32> to vector<2x128xf32>
    %99 = vector.extract_strided_slice %96 {offsets = [0, 384], sizes = [2, 128], strides = [1, 1]} : vector<2x512xf32> to vector<2x128xf32>
    %100 = vector.extract_strided_slice %91 {offsets = [0, 256], sizes = [2, 128], strides = [1, 1]} : vector<2x512xf32> to vector<2x128xf32>
    %101 = math.tanh %100 : vector<2x128xf32>
    %102 = arith.mulf %98, %85 : vector<2x128xf32>
    %103 = arith.mulf %97, %101 : vector<2x128xf32>
    %104 = arith.addf %102, %103 : vector<2x128xf32>
    %105 = math.tanh %104 : vector<2x128xf32>
    %106 = arith.mulf %99, %105 : vector<2x128xf32>
    %c0_34 = arith.constant 0 : index
    %c5 = arith.constant 5 : index
    %c0_35 = arith.constant 0 : index
    %107 = vector.load %arg10[%c0_34, %c5, %c0_35] : memref<2x8x512xf32, #tpu.memory_space<vmem>>, vector<2x1x512xf32>
    %108 = vector.shape_cast %107 : vector<2x1x512xf32> to vector<2x512xf32>
    %cst_36 = arith.constant dense<0.000000e+00> : vector<2x512xf32>
    %109 = tpu.matmul %106, %0, %cst_36 {dimension_numbers = #tpu.dot_dimension_numbers<[1], [0], [0], [1], [0, 0, 1, 1], [], []>} : vector<2x128xf32>, vector<128x512xf32>, vector<2x512xf32> -> vector<2x512xf32>
    %110 = arith.addf %108, %109 : vector<2x512xf32>
    %111 = arith.negf %110 : vector<2x512xf32>
    %112 = math.exp %111 : vector<2x512xf32>
    %cst_37 = arith.constant 1.000000e+00 : f32
    %113 = vector.broadcast %cst_37 : f32 to vector<2x512xf32>
    %114 = arith.addf %113, %112 : vector<2x512xf32>
    %115 = arith.divf %113, %114 : vector<2x512xf32>
    %116 = vector.extract_strided_slice %115 {offsets = [0, 0], sizes = [2, 128], strides = [1, 1]} : vector<2x512xf32> to vector<2x128xf32>
    %117 = vector.extract_strided_slice %115 {offsets = [0, 128], sizes = [2, 128], strides = [1, 1]} : vector<2x512xf32> to vector<2x128xf32>
    %118 = vector.extract_strided_slice %115 {offsets = [0, 384], sizes = [2, 128], strides = [1, 1]} : vector<2x512xf32> to vector<2x128xf32>
    %119 = vector.extract_strided_slice %110 {offsets = [0, 256], sizes = [2, 128], strides = [1, 1]} : vector<2x512xf32> to vector<2x128xf32>
    %120 = math.tanh %119 : vector<2x128xf32>
    %121 = arith.mulf %117, %104 : vector<2x128xf32>
    %122 = arith.mulf %116, %120 : vector<2x128xf32>
    %123 = arith.addf %121, %122 : vector<2x128xf32>
    %124 = math.tanh %123 : vector<2x128xf32>
    %125 = arith.mulf %118, %124 : vector<2x128xf32>
    %c0_38 = arith.constant 0 : index
    %c6 = arith.constant 6 : index
    %c0_39 = arith.constant 0 : index
    %126 = vector.load %arg10[%c0_38, %c6, %c0_39] : memref<2x8x512xf32, #tpu.memory_space<vmem>>, vector<2x1x512xf32>
    %127 = vector.shape_cast %126 : vector<2x1x512xf32> to vector<2x512xf32>
    %cst_40 = arith.constant dense<0.000000e+00> : vector<2x512xf32>
    %128 = tpu.matmul %125, %0, %cst_40 {dimension_numbers = #tpu.dot_dimension_numbers<[1], [0], [0], [1], [0, 0, 1, 1], [], []>} : vector<2x128xf32>, vector<128x512xf32>, vector<2x512xf32> -> vector<2x512xf32>
    %129 = arith.addf %127, %128 : vector<2x512xf32>
    %130 = arith.negf %129 : vector<2x512xf32>
    %131 = math.exp %130 : vector<2x512xf32>
    %cst_41 = arith.constant 1.000000e+00 : f32
    %132 = vector.broadcast %cst_41 : f32 to vector<2x512xf32>
    %133 = arith.addf %132, %131 : vector<2x512xf32>
    %134 = arith.divf %132, %133 : vector<2x512xf32>
    %135 = vector.extract_strided_slice %134 {offsets = [0, 0], sizes = [2, 128], strides = [1, 1]} : vector<2x512xf32> to vector<2x128xf32>
    %136 = vector.extract_strided_slice %134 {offsets = [0, 128], sizes = [2, 128], strides = [1, 1]} : vector<2x512xf32> to vector<2x128xf32>
    %137 = vector.extract_strided_slice %134 {offsets = [0, 384], sizes = [2, 128], strides = [1, 1]} : vector<2x512xf32> to vector<2x128xf32>
    %138 = vector.extract_strided_slice %129 {offsets = [0, 256], sizes = [2, 128], strides = [1, 1]} : vector<2x512xf32> to vector<2x128xf32>
    %139 = math.tanh %138 : vector<2x128xf32>
    %140 = arith.mulf %136, %123 : vector<2x128xf32>
    %141 = arith.mulf %135, %139 : vector<2x128xf32>
    %142 = arith.addf %140, %141 : vector<2x128xf32>
    %143 = math.tanh %142 : vector<2x128xf32>
    %144 = arith.mulf %137, %143 : vector<2x128xf32>
    %c0_42 = arith.constant 0 : index
    %c7 = arith.constant 7 : index
    %c0_43 = arith.constant 0 : index
    %145 = vector.load %arg10[%c0_42, %c7, %c0_43] : memref<2x8x512xf32, #tpu.memory_space<vmem>>, vector<2x1x512xf32>
    %146 = vector.shape_cast %145 : vector<2x1x512xf32> to vector<2x512xf32>
    %cst_44 = arith.constant dense<0.000000e+00> : vector<2x512xf32>
    %147 = tpu.matmul %144, %0, %cst_44 {dimension_numbers = #tpu.dot_dimension_numbers<[1], [0], [0], [1], [0, 0, 1, 1], [], []>} : vector<2x128xf32>, vector<128x512xf32>, vector<2x512xf32> -> vector<2x512xf32>
    %148 = arith.addf %146, %147 : vector<2x512xf32>
    %149 = arith.negf %148 : vector<2x512xf32>
    %150 = math.exp %149 : vector<2x512xf32>
    %cst_45 = arith.constant 1.000000e+00 : f32
    %151 = vector.broadcast %cst_45 : f32 to vector<2x512xf32>
    %152 = arith.addf %151, %150 : vector<2x512xf32>
    %153 = arith.divf %151, %152 : vector<2x512xf32>
    %154 = vector.extract_strided_slice %153 {offsets = [0, 0], sizes = [2, 128], strides = [1, 1]} : vector<2x512xf32> to vector<2x128xf32>
    %155 = vector.extract_strided_slice %153 {offsets = [0, 128], sizes = [2, 128], strides = [1, 1]} : vector<2x512xf32> to vector<2x128xf32>
    %156 = vector.extract_strided_slice %153 {offsets = [0, 384], sizes = [2, 128], strides = [1, 1]} : vector<2x512xf32> to vector<2x128xf32>
    %157 = vector.extract_strided_slice %148 {offsets = [0, 256], sizes = [2, 128], strides = [1, 1]} : vector<2x512xf32> to vector<2x128xf32>
    %158 = math.tanh %157 : vector<2x128xf32>
    %159 = arith.mulf %155, %142 : vector<2x128xf32>
    %160 = arith.mulf %154, %158 : vector<2x128xf32>
    %161 = arith.addf %159, %160 : vector<2x128xf32>
    %162 = math.tanh %161 : vector<2x128xf32>
    %163 = arith.mulf %156, %162 : vector<2x128xf32>
    %cst_46 = arith.constant 0.000000e+00 : f32
    %164 = vector.broadcast %cst_46 : f32 to vector<2x128xf32>
    %165 = arith.maximumf %163, %164 : vector<2x128xf32>
    %c0_47 = arith.constant 0 : index
    %c0_48 = arith.constant 0 : index
    %166 = vector.load %arg5[%c0_47, %c0_48] : memref<128x128xf32, #tpu.memory_space<vmem>>, vector<128x128xf32>
    %cst_49 = arith.constant dense<0.000000e+00> : vector<2x128xf32>
    %167 = tpu.matmul %165, %166, %cst_49 {dimension_numbers = #tpu.dot_dimension_numbers<[1], [0], [0], [1], [0, 0, 1, 1], [], []>} : vector<2x128xf32>, vector<128x128xf32>, vector<2x128xf32> -> vector<2x128xf32>
    %c0_50 = arith.constant 0 : index
    %c0_51 = arith.constant 0 : index
    %168 = vector.load %arg6[%c0_50, %c0_51] : memref<1x128xf32, #tpu.memory_space<vmem>>, vector<1x128xf32>
    %169 = vector.broadcast %168 : vector<1x128xf32> to vector<2x128xf32>
    %170 = arith.addf %167, %169 : vector<2x128xf32>
    %cst_52 = arith.constant 0.000000e+00 : f32
    %171 = vector.broadcast %cst_52 : f32 to vector<2x128xf32>
    %172 = arith.maximumf %170, %171 : vector<2x128xf32>
    %c0_53 = arith.constant 0 : index
    %c0_54 = arith.constant 0 : index
    %173 = vector.load %arg7[%c0_53, %c0_54] : memref<128x128xf32, #tpu.memory_space<vmem>>, vector<128x128xf32>
    %cst_55 = arith.constant dense<0.000000e+00> : vector<2x128xf32>
    %174 = tpu.matmul %172, %173, %cst_55 {dimension_numbers = #tpu.dot_dimension_numbers<[1], [0], [0], [1], [0, 0, 1, 1], [], []>} : vector<2x128xf32>, vector<128x128xf32>, vector<2x128xf32> -> vector<2x128xf32>
    %c0_56 = arith.constant 0 : index
    %c0_57 = arith.constant 0 : index
    %175 = vector.load %arg8[%c0_56, %c0_57] : memref<1x128xf32, #tpu.memory_space<vmem>>, vector<1x128xf32>
    %176 = vector.broadcast %175 : vector<1x128xf32> to vector<2x128xf32>
    %177 = arith.addf %174, %176 : vector<2x128xf32>
    %c0_58 = arith.constant 0 : index
    %c0_59 = arith.constant 0 : index
    %178 = vector.load %arg9[%c0_58, %c0_59] : memref<2x128xf32, #tpu.memory_space<vmem>>, vector<2x128xf32>
    tpu.vector_store %arg9[%c0_58, %c0_59], %177 {strides = array<i32>} : memref<2x128xf32, #tpu.memory_space<vmem>>, vector<2x128xf32>,
    return
  }
  func.func @transform_0(%arg0: i32) -> (i32, i32, i32) {
    %c0_i32 = arith.constant 0 : i32
    %c0_i32_0 = arith.constant 0 : i32
    %c0_i32_1 = arith.constant 0 : i32
    return %arg0, %c0_i32, %c0_i32_0 : i32, i32, i32
  }
  func.func @transform_1(%arg0: i32) -> (i32, i32) {
    %c0_i32 = arith.constant 0 : i32
    %c0_i32_0 = arith.constant 0 : i32
    %c0_i32_1 = arith.constant 0 : i32
    return %c0_i32, %c0_i32_0 : i32, i32
  }
  func.func @transform_2(%arg0: i32) -> (i32, i32) {
    %c0_i32 = arith.constant 0 : i32
    %c0_i32_0 = arith.constant 0 : i32
    %c0_i32_1 = arith.constant 0 : i32
    return %c0_i32, %c0_i32_0 : i32, i32
  }
  func.func @transform_3(%arg0: i32) -> (i32, i32) {
    %c0_i32 = arith.constant 0 : i32
    %c0_i32_0 = arith.constant 0 : i32
    %c0_i32_1 = arith.constant 0 : i32
    return %c0_i32, %c0_i32_0 : i32, i32
  }
  func.func @transform_4(%arg0: i32) -> (i32, i32) {
    %c0_i32 = arith.constant 0 : i32
    %c0_i32_0 = arith.constant 0 : i32
    %c0_i32_1 = arith.constant 0 : i32
    return %c0_i32, %c0_i32_0 : i32, i32
  }
  func.func @transform_5(%arg0: i32) -> (i32, i32) {
    %c0_i32 = arith.constant 0 : i32
    %c0_i32_0 = arith.constant 0 : i32
    %c0_i32_1 = arith.constant 0 : i32
    return %c0_i32, %c0_i32_0 : i32, i32
  }
  func.func @transform_6(%arg0: i32) -> (i32, i32) {
    %c0_i32 = arith.constant 0 : i32
    %c0_i32_0 = arith.constant 0 : i32
    %c0_i32_1 = arith.constant 0 : i32
    return %c0_i32, %c0_i32_0 : i32, i32
  }
  func.func @transform_7(%arg0: i32) -> (i32, i32) {
    %c0_i32 = arith.constant 0 : i32
    %c0_i32_0 = arith.constant 0 : i32
    %c0_i32_1 = arith.constant 0 : i32
    return %c0_i32, %c0_i32_0 : i32, i32
  }
  func.func @transform_8(%arg0: i32) -> (i32, i32) {
    %c0_i32 = arith.constant 0 : i32
    %c0_i32_0 = arith.constant 0 : i32
    return %arg0, %c0_i32 : i32, i32
  }
}

</mosaic_0001>

<llo_original>
// kernel: lstm1_forward.1
$region0: #{lstm1_forward.1}
  #allocation0 [shape = 'u32[]', space=smem, size = 0x4, offset = 0x4, fixed_abs, tag = 'smem constant byte address 0x4 - core index']
  #allocation1 [shape = 'u32[144,128]{1,0:T(1,128)}', space=vmem, size = 0x12000, scoped, tag = 'internal scratch']
  #allocation2 [shape = 'f32[2,8,512]{2,1,0:T(8,128)}', space=vmem, size = 0x8000, scoped, tag = 'scratch operand']
  %s0 = inlined_call_operand.hbm [shape: f32[2,8,33], index: 0, kind: input, shape index: {}]
  %s1 = inlined_call_operand.hbm [shape: f32[33,512], index: 1, kind: input, shape index: {}]
  %s2 = inlined_call_operand.hbm [shape: f32[128,512], index: 2, kind: input, shape index: {}]
  %s3 = inlined_call_operand.vmem [shape: f32[1,512], index: 3, kind: input, shape index: {}]
  %s4 = inlined_call_operand.hbm [shape: f32[128,128], index: 4, kind: input, shape index: {}]
  %s5 = inlined_call_operand.vmem [shape: f32[1,128], index: 5, kind: input, shape index: {}]
  %s6 = inlined_call_operand.hbm [shape: f32[128,128], index: 6, kind: input, shape index: {}]
  %s7 = inlined_call_operand.hbm [shape: f32[1,128], index: 7, kind: input, shape index: {}]
  %s8 = inlined_call_operand.vmem [shape: f32[2,128], index: 8, kind: output, shape index: {}]
  %s9 = sld [smem:[#allocation0]]
  $region66: #{lstm1_forward.1} parent=0
    _
  %s11 = ssub.s32 1, %s9
  %s12 = scalar_select 0, %s11, %s9
  $region1: #{lstm1_forward.1} parent=0
    #allocation3 [shape = 'u8[8192]{0}', space=vmem, size = 0x2000, scoped, tag = 'input window, operand 0, single buffered']
    #allocation4 [shape = 's32[1]{0}', space=sflag, size = 0x4, scoped, tag = 'scoped memory for lstm1_forward.1']
    #allocation5 [shape = 'u8[81920]{0}', space=vmem, size = 0x14000, scoped, tag = 'input window, operand 1, single buffered']
    #allocation6 [shape = 's32[1]{0}', space=sflag, size = 0x4, scoped, tag = 'scoped memory for lstm1_forward.1']
    #allocation7 [shape = 'u8[262144]{0}', space=vmem, size = 0x40000, scoped, tag = 'input window, operand 2, single buffered']
    #allocation8 [shape = 'u8[65536]{0}', space=vmem, size = 0x10000, scoped, tag = 'input window, operand 4, single buffered']
    #allocation9 [shape = 's32[1]{0}', space=sflag, size = 0x4, scoped, tag = 'scoped memory for lstm1_forward.1']
    #allocation10 [shape = 'u8[65536]{0}', space=vmem, size = 0x10000, scoped, tag = 'input window, operand 6, single buffered']
    #allocation11 [shape = 'u8[512]{0}', space=vmem, size = 0x400, scoped, tag = 'input window, operand 7, single buffered']
    #allocation12 [shape = 's32[1]{0}', space=sflag, size = 0x4, scoped, tag = 'scoped memory for lstm1_forward.1']
    %13 = vsyncpa [#allocation4], 0
    %14 = vsyncpa [#allocation6], 0
    %15 = vsyncpa [#allocation9], 0
    %16 = vsyncpa [#allocation12], 0
    // Predicated region
    $region2: #{lstm1_forward.1} parent=1 // pred_check
      _
    $region3: #{lstm1_forward.1} parent=1 // pred_check_branch
      %18 = sbr.rel (0) target = $region5
    $region4: #{lstm1_forward.1} parent=1 // pred_region
      %s20 = ssub.s32 256, 256
      %21 = vsyncadd [#allocation4], %s20
      %s22 = sshll.u32 [#allocation3], 4
      %s23 = int_to_ptr.vmem [resolvable:$true] %s22
      %28 = dma.hbm_to_vmem [thread:$0]  %s0, 256, %s23, [#allocation4], 128, 128, 8
    $region5: #{lstm1_forward.1} parent=1 // pred_fallthru
      _
    // Predicated region
    $region6: #{lstm1_forward.1} parent=1 // pred_check
      _
    $region7: #{lstm1_forward.1} parent=1 // pred_check_branch
      %30 = sbr.rel (0) target = $region9
    $region8: #{lstm1_forward.1} parent=1 // pred_region
      %s32 = ssub.s32 2560, 2560
      %33 = vsyncadd [#allocation6], %s32
      %s34 = sshll.u32 [#allocation5], 4
      %s35 = int_to_ptr.vmem [resolvable:$true] %s34
      %40 = dma.hbm_to_vmem [thread:$0]  %s1, 2560, %s35, [#allocation6], 512, 512, 32
    $region9: #{lstm1_forward.1} parent=1 // pred_fallthru
      _
    // Predicated region
    $region10: #{lstm1_forward.1} parent=1 // pred_check
      _
    $region11: #{lstm1_forward.1} parent=1 // pred_check_branch
      %42 = sbr.rel (0) target = $region13
    $region12: #{lstm1_forward.1} parent=1 // pred_region
      %s44 = ssub.s32 8192, 8192
      %45 = vsyncadd [#allocation6], %s44
      %s46 = sshll.u32 [#allocation7], 4
      %s47 = int_to_ptr.vmem [resolvable:$true] %s46
      %52 = dma.hbm_to_vmem [thread:$0]  %s2, 8192, %s47, [#allocation6], 512, 512, 32
    $region13: #{lstm1_forward.1} parent=1 // pred_fallthru
      _
    // Predicated region
    $region14: #{lstm1_forward.1} parent=1 // pred_check
      _
    $region15: #{lstm1_forward.1} parent=1 // pred_check_branch
      %54 = sbr.rel (0) target = $region17
    $region16: #{lstm1_forward.1} parent=1 // pred_region
      _
    $region17: #{lstm1_forward.1} parent=1 // pred_fallthru
      _
    // Predicated region
    $region18: #{lstm1_forward.1} parent=1 // pred_check
      _
    $region19: #{lstm1_forward.1} parent=1 // pred_check_branch
      %56 = sbr.rel (0) target = $region21
    $region20: #{lstm1_forward.1} parent=1 // pred_region
      %s58 = ssub.s32 2048, 2048
      %59 = vsyncadd [#allocation9], %s58
      %s60 = sshll.u32 [#allocation8], 4
      %s61 = int_to_ptr.vmem [resolvable:$true] %s60
      %66 = dma.hbm_to_vmem [thread:$0]  %s4, 2048, %s61, [#allocation9], 128, 128, 8
    $region21: #{lstm1_forward.1} parent=1 // pred_fallthru
      _
    // Predicated region
    $region22: #{lstm1_forward.1} parent=1 // pred_check
      _
    $region23: #{lstm1_forward.1} parent=1 // pred_check_branch
      %68 = sbr.rel (0) target = $region25
    $region24: #{lstm1_forward.1} parent=1 // pred_region
      _
    $region25: #{lstm1_forward.1} parent=1 // pred_fallthru
      _
    // Predicated region
    $region26: #{lstm1_forward.1} parent=1 // pred_check
      _
    $region27: #{lstm1_forward.1} parent=1 // pred_check_branch
      %70 = sbr.rel (0) target = $region29
    $region28: #{lstm1_forward.1} parent=1 // pred_region
      %s72 = ssub.s32 2048, 2048
      %73 = vsyncadd [#allocation9], %s72
      %s74 = sshll.u32 [#allocation10], 4
      %s75 = int_to_ptr.vmem [resolvable:$true] %s74
      %80 = dma.hbm_to_vmem [thread:$0]  %s6, 2048, %s75, [#allocation9], 128, 128, 8
    $region29: #{lstm1_forward.1} parent=1 // pred_fallthru
      _
    // Predicated region
    $region30: #{lstm1_forward.1} parent=1 // pred_check
      _
    $region31: #{lstm1_forward.1} parent=1 // pred_check_branch
      %82 = sbr.rel (0) target = $region33
    $region32: #{lstm1_forward.1} parent=1 // pred_region
      %s84 = ssub.s32 16, 16
      %85 = vsyncadd [#allocation12], %s84
      %s87 = sshll.u32 [#allocation11], 4
      %s88 = int_to_ptr.vmem [resolvable:$true] %s87
      %90 = dma.hbm_to_vmem [thread:$0]  %s7, 16, %s88, [#allocation12]
    $region33: #{lstm1_forward.1} parent=1 // pred_fallthru
      _
    // Predicated region
    $region34: #{lstm1_forward.1} parent=1 // pred_check
      _
    $region35: #{lstm1_forward.1} parent=1 // pred_check_branch
      %92 = sbr.rel (0) target = $region37
    $region36: #{lstm1_forward.1} parent=1 // pred_region
      %93 = dma.done [#allocation4], 256
    $region37: #{lstm1_forward.1} parent=1 // pred_fallthru
      _
    // Predicated region
    $region38: #{lstm1_forward.1} parent=1 // pred_check
      _
    $region39: #{lstm1_forward.1} parent=1 // pred_check_branch
      %95 = sbr.rel (0) target = $region41
    $region40: #{lstm1_forward.1} parent=1 // pred_region
      %96 = dma.done [#allocation6], 2560
    $region41: #{lstm1_forward.1} parent=1 // pred_fallthru
      _
    // Predicated region
    $region42: #{lstm1_forward.1} parent=1 // pred_check
      _
    $region43: #{lstm1_forward.1} parent=1 // pred_check_branch
      %98 = sbr.rel (0) target = $region45
    $region44: #{lstm1_forward.1} parent=1 // pred_region
      %99 = dma.done [#allocation6], 8192
    $region45: #{lstm1_forward.1} parent=1 // pred_fallthru
      _
    // Predicated region
    $region46: #{lstm1_forward.1} parent=1 // pred_check
      _
    $region47: #{lstm1_forward.1} parent=1 // pred_check_branch
      %101 = sbr.rel (0) target = $region49
    $region48: #{lstm1_forward.1} parent=1 // pred_region
      %102 = dma.done [#allocation9], 2048
    $region49: #{lstm1_forward.1} parent=1 // pred_fallthru
      _
    // Predicated region
    $region50: #{lstm1_forward.1} parent=1 // pred_check
      _
    $region51: #{lstm1_forward.1} parent=1 // pred_check_branch
      %104 = sbr.rel (0) target = $region53
    $region52: #{lstm1_forward.1} parent=1 // pred_region
      %105 = dma.done [#allocation9], 2048
    $region53: #{lstm1_forward.1} parent=1 // pred_fallthru
      _
    // Predicated region
    $region54: #{lstm1_forward.1} parent=1 // pred_check
      _
    $region55: #{lstm1_forward.1} parent=1 // pred_check_branch
      %107 = sbr.rel (0) target = $region57
    $region56: #{lstm1_forward.1} parent=1 // pred_region
      %108 = dma.done [#allocation12], 16
    $region57: #{lstm1_forward.1} parent=1 // pred_fallthru
      _
    %v109 = vld [vmem:[#allocation7] sm:$0xff]
    %v110 = vld [vmem:[#allocation7 + $0x8] sm:$0xff]
    %v111 = vld [vmem:[#allocation7 + $0x10] sm:$0xff]
    %v112 = vld [vmem:[#allocation7 + $0x18] sm:$0xff]
    %v113 = vld [vmem:[#allocation7 + $0x20] sm:$0xff]
    %v114 = vld [vmem:[#allocation7 + $0x28] sm:$0xff]
    %v115 = vld [vmem:[#allocation7 + $0x30] sm:$0xff]
    %v116 = vld [vmem:[#allocation7 + $0x38] sm:$0xff]
    %v117 = vld [vmem:[#allocation7 + $0x40] sm:$0xff]
    %v118 = vld [vmem:[#allocation7 + $0x48] sm:$0xff]
    %v119 = vld [vmem:[#allocation7 + $0x50] sm:$0xff]
    %v120 = vld [vmem:[#allocation7 + $0x58] sm:$0xff]
    %v121 = vld [vmem:[#allocation7 + $0x60] sm:$0xff]
    %v122 = vld [vmem:[#allocation7 + $0x68] sm:$0xff]
    %v123 = vld [vmem:[#allocation7 + $0x70] sm:$0xff]
    %v124 = vld [vmem:[#allocation7 + $0x78] sm:$0xff]
    %v125 = vld [vmem:[#allocation7 + $0x80] sm:$0xff]
    %v126 = vld [vmem:[#allocation7 + $0x88] sm:$0xff]
    %v127 = vld [vmem:[#allocation7 + $0x90] sm:$0xff]
    %v128 = vld [vmem:[#allocation7 + $0x98] sm:$0xff]
    %v129 = vld [vmem:[#allocation7 + $0xa0] sm:$0xff]
    %v130 = vld [vmem:[#allocation7 + $0xa8] sm:$0xff]
    %v131 = vld [vmem:[#allocation7 + $0xb0] sm:$0xff]
    %v132 = vld [vmem:[#allocation7 + $0xb8] sm:$0xff]
    %v133 = vld [vmem:[#allocation7 + $0xc0] sm:$0xff]
    %v134 = vld [vmem:[#allocation7 + $0xc8] sm:$0xff]
    %v135 = vld [vmem:[#allocation7 + $0xd0] sm:$0xff]
    %v136 = vld [vmem:[#allocation7 + $0xd8] sm:$0xff]
    %v137 = vld [vmem:[#allocation7 + $0xe0] sm:$0xff]
    %v138 = vld [vmem:[#allocation7 + $0xe8] sm:$0xff]
    %v139 = vld [vmem:[#allocation7 + $0xf0] sm:$0xff]
    %v140 = vld [vmem:[#allocation7 + $0xf8] sm:$0xff]
    %v141 = vld [vmem:[#allocation7 + $0x100] sm:$0xff]
    %v142 = vld [vmem:[#allocation7 + $0x108] sm:$0xff]
    %v143 = vld [vmem:[#allocation7 + $0x110] sm:$0xff]
    %v144 = vld [vmem:[#allocation7 + $0x118] sm:$0xff]
    %v145 = vld [vmem:[#allocation7 + $0x120] sm:$0xff]
    %v146 = vld [vmem:[#allocation7 + $0x128] sm:$0xff]
    %v147 = vld [vmem:[#allocation7 + $0x130] sm:$0xff]
    %v148 = vld [vmem:[#allocation7 + $0x138] sm:$0xff]
    %v149 = vld [vmem:[#allocation7 + $0x140] sm:$0xff]
    %v150 = vld [vmem:[#allocation7 + $0x148] sm:$0xff]
    %v151 = vld [vmem:[#allocation7 + $0x150] sm:$0xff]
    %v152 = vld [vmem:[#allocation7 + $0x158] sm:$0xff]
    %v153 = vld [vmem:[#allocation7 + $0x160] sm:$0xff]
    %v154 = vld [vmem:[#allocation7 + $0x168] sm:$0xff]
    %v155 = vld [vmem:[#allocation7 + $0x170] sm:$0xff]
    %v156 = vld [vmem:[#allocation7 + $0x178] sm:$0xff]
    %v157 = vld [vmem:[#allocation7 + $0x180] sm:$0xff]
    %v158 = vld [vmem:[#allocation7 + $0x188] sm:$0xff]
    %v159 = vld [vmem:[#allocation7 + $0x190] sm:$0xff]
    %v160 = vld [vmem:[#allocation7 + $0x198] sm:$0xff]
    %v161 = vld [vmem:[#allocation7 + $0x1a0] sm:$0xff]
    %v162 = vld [vmem:[#allocation7 + $0x1a8] sm:$0xff]
    %v163 = vld [vmem:[#allocation7 + $0x1b0] sm:$0xff]
    %v164 = vld [vmem:[#allocation7 + $0x1b8] sm:$0xff]
    %v165 = vld [vmem:[#allocation7 + $0x1c0] sm:$0xff]
    %v166 = vld [vmem:[#allocation7 + $0x1c8] sm:$0xff]
    %v167 = vld [vmem:[#allocation7 + $0x1d0] sm:$0xff]
    %v168 = vld [vmem:[#allocation7 + $0x1d8] sm:$0xff]
    %v169 = vld [vmem:[#allocation7 + $0x1e0] sm:$0xff]
    %v170 = vld [vmem:[#allocation7 + $0x1e8] sm:$0xff]
    %v171 = vld [vmem:[#allocation7 + $0x1f0] sm:$0xff]
    %v172 = vld [vmem:[#allocation7 + $0x1f8] sm:$0xff]
    %v173 = vld [vmem:[#allocation3] sm:$0xff]
    %v174 = vld [vmem:[#allocation3 + $0x8] sm:$0xff]
    %v175 = vld [vmem:[#allocation5] sm:$0xff]
    %v176 = vld [vmem:[#allocation5 + $0x8] sm:$0xff]
    %v177 = vld [vmem:[#allocation5 + $0x10] sm:$0xff]
    %v178 = vld [vmem:[#allocation5 + $0x18] sm:$0xff]
    %v179 = vld [vmem:[#allocation5 + $0x20] sm:$0xff]
    %v180 = vld [vmem:[#allocation5 + $0x28] sm:$0xff]
    %v181 = vld [vmem:[#allocation5 + $0x30] sm:$0xff]
    %v182 = vld [vmem:[#allocation5 + $0x38] sm:$0xff]
    %v183 = vld [vmem:[#allocation5 + $0x40] sm:$0xff]
    %v184 = vld [vmem:[#allocation5 + $0x48] sm:$0xff]
    %v185 = vld [vmem:[#allocation5 + $0x50] sm:$0xff]
    %v186 = vld [vmem:[#allocation5 + $0x58] sm:$0xff]
    %v187 = vld [vmem:[#allocation5 + $0x60] sm:$0xff]
    %v188 = vld [vmem:[#allocation5 + $0x68] sm:$0xff]
    %v189 = vld [vmem:[#allocation5 + $0x70] sm:$0xff]
    %v190 = vld [vmem:[#allocation5 + $0x78] sm:$0xff]
    %v191 = vld [vmem:[#allocation5 + $0x80] sm:$0x1]
    %v192 = vld [vmem:[#allocation5 + $0x88] sm:$0x1]
    %v193 = vld [vmem:[#allocation5 + $0x90] sm:$0x1]
    %v194 = vld [vmem:[#allocation5 + $0x98] sm:$0x1]
    %v195 = vld [vmem:[%s3] sm:$0xf]
    %v197 = vlaneseq
    %v198 = vshrl.u32 %v197, 7
    %v199 = vsub.s32 0, %v198
    %v200 = vrot.slane %v195, %v199
    %v201 = vlaneseq
    %v202 = vshrl.u32 %v201, 7
    %v203 = vsub.s32 1, %v202
    %v204 = vrot.slane %v195, %v203
    %v205 = vlaneseq
    %v206 = vshrl.u32 %v205, 7
    %v207 = vsub.s32 2, %v206
    %v208 = vrot.slane %v195, %v207
    %v209 = vlaneseq
    %v210 = vshrl.u32 %v209, 7
    %v211 = vsub.s32 3, %v210
    %v212 = vrot.slane %v195, %v211
    %vm217 = vcmask 269312
    %v219 = vsel %vm217, %v173, 0
    %v222 = vsel %vm217, %v174, 0
    %vm224 = vcmask 1040384
    %v226 = vsel %vm224, %v191, 0
    %v229 = vsel %vm224, %v192, 0
    %v232 = vsel %vm224, %v193, 0
    %v235 = vsel %vm224, %v194, 0
    %237 = vmatprep.subr.mxu0 0.0
    %238 = vmatpush1.msra.mxu0 0.0
    %239 = vmatprep.subr.mxu0 0.0
    %240 = vmatpush1.msra.mxu0 0.0
    %241 = vmatprep.subr.mxu0 0.0
    %242 = vmatpush1.msra.mxu0 0.0
    %243 = vmatprep.subr.mxu0 0.0
    %244 = vmatpush1.msra.mxu0 0.0
    %245 = vmatprep.subr.mxu0 0.0
    %246 = vmatpush1.msra.mxu0 0.0
    %247 = vmatprep.subr.mxu0 0.0
    %248 = vmatpush1.msra.mxu0 0.0
    %249 = vmatprep.subr.mxu0 0.0
    %250 = vmatpush1.msra.mxu0 0.0
    %251 = vmatprep.subr.mxu0 0.0
    %252 = vmatpush1.msra.mxu0 0.0
    %253 = vmatprep.subr.mxu0 0.0
    %254 = vmatpush1.msra.mxu0 0.0
    %255 = vmatprep.subr.mxu0 0.0
    %256 = vmatpush1.msra.mxu0 0.0
    %257 = vmatprep.subr.mxu0 0.0
    %258 = vmatpush1.msra.mxu0 0.0
    %259 = vmatprep.subr.mxu0 %v229
    %260 = vmatpush1.msra.mxu0 %v226
    %261 = vmatprep.subr.mxu0 %v188
    %262 = vmatpush1.msra.mxu0 %v187
    %263 = vmatprep.subr.mxu0 %v184
    %264 = vmatpush1.msra.mxu0 %v183
    %265 = vmatprep.subr.mxu0 %v180
    %266 = vmatpush1.msra.mxu0 %v179
    %267 = vmatprep.subr.mxu0 %v176
    %268 = vmatpush1.msra.mxu0 %v175
    %269 = vmatprep.subr.mxu0 0.0
    %270 = vmatpush2.msra.mxu0 0.0
    %271 = vmatprep.subr.mxu0 0.0
    %272 = vmatpush2.msra.mxu0 0.0
    %273 = vmatprep.subr.mxu0 0.0
    %274 = vmatpush2.msra.mxu0 0.0
    %275 = vmatprep.subr.mxu0 0.0
    %276 = vmatpush2.msra.mxu0 0.0
    %277 = vmatprep.subr.mxu0 0.0
    %278 = vmatpush2.msra.mxu0 0.0
    %279 = vmatprep.subr.mxu0 0.0
    %280 = vmatpush2.msra.mxu0 0.0
    %281 = vmatprep.subr.mxu0 0.0
    %282 = vmatpush2.msra.mxu0 0.0
    %283 = vmatprep.subr.mxu0 0.0
    %284 = vmatpush2.msra.mxu0 0.0
    %285 = vmatprep.subr.mxu0 0.0
    %286 = vmatpush2.msra.mxu0 0.0
    %287 = vmatprep.subr.mxu0 0.0
    %288 = vmatpush2.msra.mxu0 0.0
    %289 = vmatprep.subr.mxu0 0.0
    %290 = vmatpush2.msra.mxu0 0.0
    %291 = vmatprep.subr.mxu0 0.0
    %292 = vmatpush2.msra.mxu0 0.0
    %293 = vmatprep.subr.mxu0 0.0
    %294 = vmatpush2.msra.mxu0 0.0
    %295 = vmatprep.subr.mxu0 0.0
    %296 = vmatpush2.msra.mxu0 0.0
    %297 = vmatprep.subr.mxu0 0.0
    %298 = vmatpush2.msra.mxu0 0.0
    %299 = vmatprep.subr.mxu0 0.0
    %300 = vmatpush2.msra.mxu0 0.0
    %301 = vmatprep.mubr.f32.mxu0 0.0
    %302 = vmatmul.mubr.f32.gmra.mxu0 %v219
    %v303 = vpop.f32.mrf.mxu0
    %v304 = vadd.f32 %v200, %v303
    %v305 = vpop.f32.mrf.mxu0
    %v306 = vadd.f32 %v204, %v305
    %307 = vmatprep.mubr.f32.mxu0 0.0
    %308 = vmatmul.mubr.f32.gmra.mxu0 %v222
    %v309 = vpop.f32.mrf.mxu0
    %v310 = vadd.f32 %v200, %v309
    %v311 = vpop.f32.mrf.mxu0
    %v312 = vadd.f32 %v204, %v311
    %313 = vdwg.mxu0
    %314 = vmatprep.subr.mxu0 0.0
    %315 = vmatpush1.msra.mxu0 0.0
    %316 = vmatprep.subr.mxu0 0.0
    %317 = vmatpush1.msra.mxu0 0.0
    %318 = vmatprep.subr.mxu0 0.0
    %319 = vmatpush1.msra.mxu0 0.0
    %320 = vmatprep.subr.mxu0 0.0
    %321 = vmatpush1.msra.mxu0 0.0
    %322 = vmatprep.subr.mxu0 0.0
    %323 = vmatpush1.msra.mxu0 0.0
    %324 = vmatprep.subr.mxu0 0.0
    %325 = vmatpush1.msra.mxu0 0.0
    %326 = vmatprep.subr.mxu0 0.0
    %327 = vmatpush1.msra.mxu0 0.0
    %328 = vmatprep.subr.mxu0 0.0
    %329 = vmatpush1.msra.mxu0 0.0
    %330 = vmatprep.subr.mxu0 0.0
    %331 = vmatpush1.msra.mxu0 0.0
    %332 = vmatprep.subr.mxu0 0.0
    %333 = vmatpush1.msra.mxu0 0.0
    %334 = vmatprep.subr.mxu0 0.0
    %335 = vmatpush1.msra.mxu0 0.0
    %336 = vmatprep.subr.mxu0 %v235
    %337 = vmatpush1.msra.mxu0 %v232
    %338 = vmatprep.subr.mxu0 %v190
    %339 = vmatpush1.msra.mxu0 %v189
    %340 = vmatprep.subr.mxu0 %v186
    %341 = vmatpush1.msra.mxu0 %v185
    %342 = vmatprep.subr.mxu0 %v182
    %343 = vmatpush1.msra.mxu0 %v181
    %344 = vmatprep.subr.mxu0 %v178
    %345 = vmatpush1.msra.mxu0 %v177
    %346 = vmatprep.subr.mxu0 0.0
    %347 = vmatpush2.msra.mxu0 0.0
    %348 = vmatprep.subr.mxu0 0.0
    %349 = vmatpush2.msra.mxu0 0.0
    %350 = vmatprep.subr.mxu0 0.0
    %351 = vmatpush2.msra.mxu0 0.0
    %352 = vmatprep.subr.mxu0 0.0
    %353 = vmatpush2.msra.mxu0 0.0
    %354 = vmatprep.subr.mxu0 0.0
    %355 = vmatpush2.msra.mxu0 0.0
    %356 = vmatprep.subr.mxu0 0.0
    %357 = vmatpush2.msra.mxu0 0.0
    %358 = vmatprep.subr.mxu0 0.0
    %359 = vmatpush2.msra.mxu0 0.0
    %360 = vmatprep.subr.mxu0 0.0
    %361 = vmatpush2.msra.mxu0 0.0
    %362 = vmatprep.subr.mxu0 0.0
    %363 = vmatpush2.msra.mxu0 0.0
    %364 = vmatprep.subr.mxu0 0.0
    %365 = vmatpush2.msra.mxu0 0.0
    %366 = vmatprep.subr.mxu0 0.0
    %367 = vmatpush2.msra.mxu0 0.0
    %368 = vmatprep.subr.mxu0 0.0
    %369 = vmatpush2.msra.mxu0 0.0
    %370 = vmatprep.subr.mxu0 0.0
    %371 = vmatpush2.msra.mxu0 0.0
    %372 = vmatprep.subr.mxu0 0.0
    %373 = vmatpush2.msra.mxu0 0.0
    %374 = vmatprep.subr.mxu0 0.0
    %375 = vmatpush2.msra.mxu0 0.0
    %376 = vmatprep.subr.mxu0 0.0
    %377 = vmatpush2.msra.mxu0 0.0
    %378 = vmatprep.mubr.f32.mxu0 0.0
    %379 = vmatmul.mubr.f32.gmra.mxu0 %v219
    %v380 = vpop.f32.mrf.mxu0
    %v381 = vadd.f32 %v208, %v380
    %v382 = vpop.f32.mrf.mxu0
    %v383 = vadd.f32 %v212, %v382
    %384 = vmatprep.mubr.f32.mxu0 0.0
    %385 = vmatmul.mubr.f32.gmra.mxu0 %v222
    %v386 = vpop.f32.mrf.mxu0
    %v387 = vadd.f32 %v208, %v386
    %v388 = vpop.f32.mrf.mxu0
    %v389 = vadd.f32 %v212, %v388
    %390 = vdwg.mxu0
    %391 = vst [vmem:[#allocation2] sm:$0xff] %v304
    %392 = vst [vmem:[#allocation2 + $0x8] sm:$0xff] %v306
    %393 = vst [vmem:[#allocation2 + $0x10] sm:$0xff] %v381
    %394 = vst [vmem:[#allocation2 + $0x18] sm:$0xff] %v383
    %395 = vst [vmem:[#allocation2 + $0x20] sm:$0xff] %v310
    %396 = vst [vmem:[#allocation2 + $0x28] sm:$0xff] %v312
    %397 = vst [vmem:[#allocation2 + $0x30] sm:$0xff] %v387
    %398 = vst [vmem:[#allocation2 + $0x38] sm:$0xff] %v389
    %v399 = vld [vmem:[#allocation2] ss:$8 sm:$0xf]
    %s400 = scalar_lea.vmem [#allocation2], 32
    %v401 = vld [vmem:[%s400] ss:$8 sm:$0xf]
    %402 = vmatprep.subr.mxu0 %v170
    %403 = vmatpush1.msra.mxu0 %v169
    %404 = vmatprep.subr.mxu0 %v166
    %405 = vmatpush1.msra.mxu0 %v165
    %406 = vmatprep.subr.mxu0 %v162
    %407 = vmatpush1.msra.mxu0 %v161
    %408 = vmatprep.subr.mxu0 %v158
    %409 = vmatpush1.msra.mxu0 %v157
    %410 = vmatprep.subr.mxu0 %v154
    %411 = vmatpush1.msra.mxu0 %v153
    %412 = vmatprep.subr.mxu0 %v150
    %413 = vmatpush1.msra.mxu0 %v149
    %414 = vmatprep.subr.mxu0 %v146
    %415 = vmatpush1.msra.mxu0 %v145
    %416 = vmatprep.subr.mxu0 %v142
    %417 = vmatpush1.msra.mxu0 %v141
    %418 = vmatprep.subr.mxu0 %v138
    %419 = vmatpush1.msra.mxu0 %v137
    %420 = vmatprep.subr.mxu0 %v134
    %421 = vmatpush1.msra.mxu0 %v133
    %422 = vmatprep.subr.mxu0 %v130
    %423 = vmatpush1.msra.mxu0 %v129
    %424 = vmatprep.subr.mxu0 %v126
    %425 = vmatpush1.msra.mxu0 %v125
    %426 = vmatprep.subr.mxu0 %v122
    %427 = vmatpush1.msra.mxu0 %v121
    %428 = vmatprep.subr.mxu0 %v118
    %429 = vmatpush1.msra.mxu0 %v117
    %430 = vmatprep.subr.mxu0 %v114
    %431 = vmatpush1.msra.mxu0 %v113
    %432 = vmatprep.subr.mxu0 %v110
    %433 = vmatpush1.msra.mxu0 %v109
    %434 = vmatprep.subr.mxu0 0.0
    %435 = vmatpush2.msra.mxu0 0.0
    %436 = vmatprep.subr.mxu0 0.0
    %437 = vmatpush2.msra.mxu0 0.0
    %438 = vmatprep.subr.mxu0 0.0
    %439 = vmatpush2.msra.mxu0 0.0
    %440 = vmatprep.subr.mxu0 0.0
    %441 = vmatpush2.msra.mxu0 0.0
    %442 = vmatprep.subr.mxu0 0.0
    %443 = vmatpush2.msra.mxu0 0.0
    %444 = vmatprep.subr.mxu0 0.0
    %445 = vmatpush2.msra.mxu0 0.0
    %446 = vmatprep.subr.mxu0 0.0
    %447 = vmatpush2.msra.mxu0 0.0
    %448 = vmatprep.subr.mxu0 0.0
    %449 = vmatpush2.msra.mxu0 0.0
    %450 = vmatprep.subr.mxu0 0.0
    %451 = vmatpush2.msra.mxu0 0.0
    %452 = vmatprep.subr.mxu0 0.0
    %453 = vmatpush2.msra.mxu0 0.0
    %454 = vmatprep.subr.mxu0 0.0
    %455 = vmatpush2.msra.mxu0 0.0
    %456 = vmatprep.subr.mxu0 0.0
    %457 = vmatpush2.msra.mxu0 0.0
    %458 = vmatprep.subr.mxu0 0.0
    %459 = vmatpush2.msra.mxu0 0.0
    %460 = vmatprep.subr.mxu0 0.0
    %461 = vmatpush2.msra.mxu0 0.0
    %462 = vmatprep.subr.mxu0 0.0
    %463 = vmatpush2.msra.mxu0 0.0
    %464 = vmatprep.subr.mxu0 0.0
    %465 = vmatpush2.msra.mxu0 0.0
    %466 = vmatprep.mubr.f32.mxu0 0.0
    %467 = vmatmul.mubr.f32.gmra.mxu0 0.0
    %v468 = vpop.f32.mrf.mxu0
    %v469 = vadd.f32 0.0, %v468
    %v470 = vpop.f32.mrf.mxu0
    %v471 = vadd.f32 0.0, %v470
    %472 = vdwg.mxu0
    %473 = vmatprep.subr.mxu0 %v172
    %474 = vmatpush1.msra.mxu0 %v171
    %475 = vmatprep.subr.mxu0 %v168
    %476 = vmatpush1.msra.mxu0 %v167
    %477 = vmatprep.subr.mxu0 %v164
    %478 = vmatpush1.msra.mxu0 %v163
    %479 = vmatprep.subr.mxu0 %v160
    %480 = vmatpush1.msra.mxu0 %v159
    %481 = vmatprep.subr.mxu0 %v156
    %482 = vmatpush1.msra.mxu0 %v155
    %483 = vmatprep.subr.mxu0 %v152
    %484 = vmatpush1.msra.mxu0 %v151
    %485 = vmatprep.subr.mxu0 %v148
    %486 = vmatpush1.msra.mxu0 %v147
    %487 = vmatprep.subr.mxu0 %v144
    %488 = vmatpush1.msra.mxu0 %v143
    %489 = vmatprep.subr.mxu0 %v140
    %490 = vmatpush1.msra.mxu0 %v139
    %491 = vmatprep.subr.mxu0 %v136
    %492 = vmatpush1.msra.mxu0 %v135
    %493 = vmatprep.subr.mxu0 %v132
    %494 = vmatpush1.msra.mxu0 %v131
    %495 = vmatprep.subr.mxu0 %v128
    %496 = vmatpush1.msra.mxu0 %v127
    %497 = vmatprep.subr.mxu0 %v124
    %498 = vmatpush1.msra.mxu0 %v123
    %499 = vmatprep.subr.mxu0 %v120
    %500 = vmatpush1.msra.mxu0 %v119
    %501 = vmatprep.subr.mxu0 %v116
    %502 = vmatpush1.msra.mxu0 %v115
    %503 = vmatprep.subr.mxu0 %v112
    %504 = vmatpush1.msra.mxu0 %v111
    %505 = vmatprep.subr.mxu0 0.0
    %506 = vmatpush2.msra.mxu0 0.0
    %507 = vmatprep.subr.mxu0 0.0
    %508 = vmatpush2.msra.mxu0 0.0
    %509 = vmatprep.subr.mxu0 0.0
    %510 = vmatpush2.msra.mxu0 0.0
    %511 = vmatprep.subr.mxu0 0.0
    %512 = vmatpush2.msra.mxu0 0.0
    %513 = vmatprep.subr.mxu0 0.0
    %514 = vmatpush2.msra.mxu0 0.0
    %515 = vmatprep.subr.mxu0 0.0
    %516 = vmatpush2.msra.mxu0 0.0
    %517 = vmatprep.subr.mxu0 0.0
    %518 = vmatpush2.msra.mxu0 0.0
    %519 = vmatprep.subr.mxu0 0.0
    %520 = vmatpush2.msra.mxu0 0.0
    %521 = vmatprep.subr.mxu0 0.0
    %522 = vmatpush2.msra.mxu0 0.0
    %523 = vmatprep.subr.mxu0 0.0
    %524 = vmatpush2.msra.mxu0 0.0
    %525 = vmatprep.subr.mxu0 0.0
    %526 = vmatpush2.msra.mxu0 0.0
    %527 = vmatprep.subr.mxu0 0.0
    %528 = vmatpush2.msra.mxu0 0.0
    %529 = vmatprep.subr.mxu0 0.0
    %530 = vmatpush2.msra.mxu0 0.0
    %531 = vmatprep.subr.mxu0 0.0
    %532 = vmatpush2.msra.mxu0 0.0
    %533 = vmatprep.subr.mxu0 0.0
    %534 = vmatpush2.msra.mxu0 0.0
    %535 = vmatprep.subr.mxu0 0.0
    %536 = vmatpush2.msra.mxu0 0.0
    %537 = vmatprep.mubr.f32.mxu0 0.0
    %538 = vmatmul.mubr.f32.gmra.mxu0 0.0
    %v539 = vpop.f32.mrf.mxu0
    %v540 = vadd.f32 0.0, %v539
    %v541 = vpop.f32.mrf.mxu0
    %v542 = vadd.f32 0.0, %v541
    %543 = vdwg.mxu0
    %v548 = vcombine.low %v469, %v471
    %v549 = vcombine.low %v540, %v542
    %v551 = vunpack.c.l.s4 1966171168
    %v552 = vunpack.c.0.s8 %v551
    %v553 = vlaneseq
    %v554 = vshrl.u32 %v553, 7
    %v555 = vsub.s32 %v552, %v554
    %v556 = vrot.slane %v548, %v555
    %v558 = vunpack.c.l.s4 1966171168
    %v559 = vunpack.c.0.s8 %v558
    %v560 = vlaneseq
    %v561 = vshrl.u32 %v560, 7
    %v562 = vsub.s32 %v559, %v561
    %v563 = vrot.slane %v549, %v562
    %v564 = vcombine.low %v556, %v563
    %v565 = vcombine.high %v556, %v563
    %v567 = vunpack.c.l.s4 1966171168
    %v568 = vunpack.c.0.s8 %v567
    %v569 = vlaneseq
    %v570 = vshrl.u32 %v569, 7
    %v571 = vsub.s32 %v568, %v570
    %v572 = vrot.slane %v564, %v571
    %v574 = vunpack.c.l.s4 1966171168
    %v575 = vunpack.c.0.s8 %v574
    %v576 = vlaneseq
    %v577 = vshrl.u32 %v576, 7
    %v578 = vsub.s32 %v575, %v577
    %v579 = vrot.slane %v565, %v578
    %v582 = vadd.f32 %v399, %v572
    %v583 = vadd.f32 %v401, %v579
    %v584 = vxor.u32 %v582, 2147483648
    %v585 = vxor.u32 %v583, 2147483648
    %v586 = vmul.f32 %v584, 1.442695
    %v587 = vpow.pop %v586
    %v588 = vmul.f32 %v585, 1.442695
    %v589 = vpow.pop %v588
    %v590 = vadd.f32 %v587, 1.0
    %v591 = vadd.f32 %v589, 1.0
    %v592 = vrcp.pop %v590
    %v593 = vmul.f32 1.0, %v592
    %v594 = vrcp.pop %v591
    %v595 = vmul.f32 1.0, %v594
    %v598 = vrot.slane %v582, 2
    %v599 = vrot.slane %v583, 2
    %v602 = vtanh.pop %v598
    %v603 = vtanh.pop %v599
    %v606 = vrot.slane %v593, 1
    %v607 = vrot.slane %v595, 1
    %v610 = vmul.f32 %v606, 0.0
    %v611 = vmul.f32 %v607, 0.0
    %v612 = vmul.f32 %v593, %v602
    %v613 = vmul.f32 %v595, %v603
    %v614 = vadd.f32 %v610, %v612
    %v615 = vadd.f32 %v611, %v613
    %v616 = vtanh.pop %v614
    %v617 = vtanh.pop %v615
    %v618 = vrot.slane %v593, 3
    %v619 = vrot.slane %v595, 3
    %v622 = vmul.f32 %v618, %v616
    %v623 = vmul.f32 %v619, %v617
    %s624 = scalar_lea.vmem [#allocation2], 1
    %v625 = vld [vmem:[%s624] ss:$8 sm:$0xf]
    %s626 = scalar_lea.vmem [#allocation2], 33
    %v627 = vld [vmem:[%s626] ss:$8 sm:$0xf]
    %v630 = vcombine.low %v622, %v623
    %v632 = vunpack.c.l.s4 1966171168
    %v633 = vunpack.c.0.s8 %v632
    %v634 = vlaneseq
    %v635 = vshrl.u32 %v634, 7
    %v636 = vsub.s32 %v633, %v635
    %v637 = vrot.slane %v630, %v636
    %v639 = vunpack.c.l.s4 1966171168
    %v640 = vunpack.c.0.s8 %v639
    %v641 = vlaneseq
    %v642 = vshrl.u32 %v641, 7
    %v643 = vsub.s32 %v640, %v642
    %v644 = vrot.slane %v637, %v643
    %646 = vmatprep.subr.mxu0 %v170
    %647 = vmatpush1.msra.mxu0 %v169
    %648 = vmatprep.subr.mxu0 %v166
    %649 = vmatpush1.msra.mxu0 %v165
    %650 = vmatprep.subr.mxu0 %v162
    %651 = vmatpush1.msra.mxu0 %v161
    %652 = vmatprep.subr.mxu0 %v158
    %653 = vmatpush1.msra.mxu0 %v157
    %654 = vmatprep.subr.mxu0 %v154
    %655 = vmatpush1.msra.mxu0 %v153
    %656 = vmatprep.subr.mxu0 %v150
    %657 = vmatpush1.msra.mxu0 %v149
    %658 = vmatprep.subr.mxu0 %v146
    %659 = vmatpush1.msra.mxu0 %v145
    %660 = vmatprep.subr.mxu0 %v142
    %661 = vmatpush1.msra.mxu0 %v141
    %662 = vmatprep.subr.mxu0 %v138
    %663 = vmatpush1.msra.mxu0 %v137
    %664 = vmatprep.subr.mxu0 %v134
    %665 = vmatpush1.msra.mxu0 %v133
    %666 = vmatprep.subr.mxu0 %v130
    %667 = vmatpush1.msra.mxu0 %v129
    %668 = vmatprep.subr.mxu0 %v126
    %669 = vmatpush1.msra.mxu0 %v125
    %670 = vmatprep.subr.mxu0 %v122
    %671 = vmatpush1.msra.mxu0 %v121
    %672 = vmatprep.subr.mxu0 %v118
    %673 = vmatpush1.msra.mxu0 %v117
    %674 = vmatprep.subr.mxu0 %v114
    %675 = vmatpush1.msra.mxu0 %v113
    %676 = vmatprep.subr.mxu0 %v110
    %677 = vmatpush1.msra.mxu0 %v109
    %678 = vmatprep.subr.mxu0 0.0
    %679 = vmatpush2.msra.mxu0 0.0
    %680 = vmatprep.subr.mxu0 0.0
    %681 = vmatpush2.msra.mxu0 0.0
    %682 = vmatprep.subr.mxu0 0.0
    %683 = vmatpush2.msra.mxu0 0.0
    %684 = vmatprep.subr.mxu0 0.0
    %685 = vmatpush2.msra.mxu0 0.0
    %686 = vmatprep.subr.mxu0 0.0
    %687 = vmatpush2.msra.mxu0 0.0
    %688 = vmatprep.subr.mxu0 0.0
    %689 = vmatpush2.msra.mxu0 0.0
    %690 = vmatprep.subr.mxu0 0.0
    %691 = vmatpush2.msra.mxu0 0.0
    %692 = vmatprep.subr.mxu0 0.0
    %693 = vmatpush2.msra.mxu0 0.0
    %694 = vmatprep.subr.mxu0 0.0
    %695 = vmatpush2.msra.mxu0 0.0
    %696 = vmatprep.subr.mxu0 0.0
    %697 = vmatpush2.msra.mxu0 0.0
    %698 = vmatprep.subr.mxu0 0.0
    %699 = vmatpush2.msra.mxu0 0.0
    %700 = vmatprep.subr.mxu0 0.0
    %701 = vmatpush2.msra.mxu0 0.0
    %702 = vmatprep.subr.mxu0 0.0
    %703 = vmatpush2.msra.mxu0 0.0
    %704 = vmatprep.subr.mxu0 0.0
    %705 = vmatpush2.msra.mxu0 0.0
    %706 = vmatprep.subr.mxu0 0.0
    %707 = vmatpush2.msra.mxu0 0.0
    %708 = vmatprep.subr.mxu0 0.0
    %709 = vmatpush2.msra.mxu0 0.0
    %710 = vmatprep.mubr.f32.mxu0 0.0
    %711 = vmatmul.mubr.f32.gmra.mxu0 %v644
    %v712 = vpop.f32.mrf.mxu0
    %v713 = vadd.f32 0.0, %v712
    %v714 = vpop.f32.mrf.mxu0
    %v715 = vadd.f32 0.0, %v714
    %716 = vdwg.mxu0
    %717 = vmatprep.subr.mxu0 %v172
    %718 = vmatpush1.msra.mxu0 %v171
    %719 = vmatprep.subr.mxu0 %v168
    %720 = vmatpush1.msra.mxu0 %v167
    %721 = vmatprep.subr.mxu0 %v164
    %722 = vmatpush1.msra.mxu0 %v163
    %723 = vmatprep.subr.mxu0 %v160
    %724 = vmatpush1.msra.mxu0 %v159
    %725 = vmatprep.subr.mxu0 %v156
    %726 = vmatpush1.msra.mxu0 %v155
    %727 = vmatprep.subr.mxu0 %v152
    %728 = vmatpush1.msra.mxu0 %v151
    %729 = vmatprep.subr.mxu0 %v148
    %730 = vmatpush1.msra.mxu0 %v147
    %731 = vmatprep.subr.mxu0 %v144
    %732 = vmatpush1.msra.mxu0 %v143
    %733 = vmatprep.subr.mxu0 %v140
    %734 = vmatpush1.msra.mxu0 %v139
    %735 = vmatprep.subr.mxu0 %v136
    %736 = vmatpush1.msra.mxu0 %v135
    %737 = vmatprep.subr.mxu0 %v132
    %738 = vmatpush1.msra.mxu0 %v131
    %739 = vmatprep.subr.mxu0 %v128
    %740 = vmatpush1.msra.mxu0 %v127
    %741 = vmatprep.subr.mxu0 %v124
    %742 = vmatpush1.msra.mxu0 %v123
    %743 = vmatprep.subr.mxu0 %v120
    %744 = vmatpush1.msra.mxu0 %v119
    %745 = vmatprep.subr.mxu0 %v116
    %746 = vmatpush1.msra.mxu0 %v115
    %747 = vmatprep.subr.mxu0 %v112
    %748 = vmatpush1.msra.mxu0 %v111
    %749 = vmatprep.subr.mxu0 0.0
    %750 = vmatpush2.msra.mxu0 0.0
    %751 = vmatprep.subr.mxu0 0.0
    %752 = vmatpush2.msra.mxu0 0.0
    %753 = vmatprep.subr.mxu0 0.0
    %754 = vmatpush2.msra.mxu0 0.0
    %755 = vmatprep.subr.mxu0 0.0
    %756 = vmatpush2.msra.mxu0 0.0
    %757 = vmatprep.subr.mxu0 0.0
    %758 = vmatpush2.msra.mxu0 0.0
    %759 = vmatprep.subr.mxu0 0.0
    %760 = vmatpush2.msra.mxu0 0.0
    %761 = vmatprep.subr.mxu0 0.0
    %762 = vmatpush2.msra.mxu0 0.0
    %763 = vmatprep.subr.mxu0 0.0
    %764 = vmatpush2.msra.mxu0 0.0
    %765 = vmatprep.subr.mxu0 0.0
    %766 = vmatpush2.msra.mxu0 0.0
    %767 = vmatprep.subr.mxu0 0.0
    %768 = vmatpush2.msra.mxu0 0.0
    %769 = vmatprep.subr.mxu0 0.0
    %770 = vmatpush2.msra.mxu0 0.0
    %771 = vmatprep.subr.mxu0 0.0
    %772 = vmatpush2.msra.mxu0 0.0
    %773 = vmatprep.subr.mxu0 0.0
    %774 = vmatpush2.msra.mxu0 0.0
    %775 = vmatprep.subr.mxu0 0.0
    %776 = vmatpush2.msra.mxu0 0.0
    %777 = vmatprep.subr.mxu0 0.0
    %778 = vmatpush2.msra.mxu0 0.0
    %779 = vmatprep.subr.mxu0 0.0
    %780 = vmatpush2.msra.mxu0 0.0
    %781 = vmatprep.mubr.f32.mxu0 0.0
    %782 = vmatmul.mubr.f32.gmra.mxu0 %v644
    %v783 = vpop.f32.mrf.mxu0
    %v784 = vadd.f32 0.0, %v783
    %v785 = vpop.f32.mrf.mxu0
    %v786 = vadd.f32 0.0, %v785
    %787 = vdwg.mxu0
    %v792 = vcombine.low %v713, %v715
    %v793 = vcombine.low %v784, %v786
    %v795 = vunpack.c.l.s4 1966171168
    %v796 = vunpack.c.0.s8 %v795
    %v797 = vlaneseq
    %v798 = vshrl.u32 %v797, 7
    %v799 = vsub.s32 %v796, %v798
    %v800 = vrot.slane %v792, %v799
    %v802 = vunpack.c.l.s4 1966171168
    %v803 = vunpack.c.0.s8 %v802
    %v804 = vlaneseq
    %v805 = vshrl.u32 %v804, 7
    %v806 = vsub.s32 %v803, %v805
    %v807 = vrot.slane %v793, %v806
    %v808 = vcombine.low %v800, %v807
    %v809 = vcombine.high %v800, %v807
    %v811 = vunpack.c.l.s4 1966171168
    %v812 = vunpack.c.0.s8 %v811
    %v813 = vlaneseq
    %v814 = vshrl.u32 %v813, 7
    %v815 = vsub.s32 %v812, %v814
    %v816 = vrot.slane %v808, %v815
    %v818 = vunpack.c.l.s4 1966171168
    %v819 = vunpack.c.0.s8 %v818
    %v820 = vlaneseq
    %v821 = vshrl.u32 %v820, 7
    %v822 = vsub.s32 %v819, %v821
    %v823 = vrot.slane %v809, %v822
    %v826 = vadd.f32 %v625, %v816
    %v827 = vadd.f32 %v627, %v823
    %v828 = vxor.u32 %v826, 2147483648
    %v829 = vxor.u32 %v827, 2147483648
    %v830 = vmul.f32 %v828, 1.442695
    %v831 = vpow.pop %v830
    %v832 = vmul.f32 %v829, 1.442695
    %v833 = vpow.pop %v832
    %v834 = vadd.f32 %v831, 1.0
    %v835 = vadd.f32 %v833, 1.0
    %v836 = vrcp.pop %v834
    %v837 = vmul.f32 1.0, %v836
    %v838 = vrcp.pop %v835
    %v839 = vmul.f32 1.0, %v838
    %v842 = vrot.slane %v826, 2
    %v843 = vrot.slane %v827, 2
    %v846 = vtanh.pop %v842
    %v847 = vtanh.pop %v843
    %v850 = vrot.slane %v837, 1
    %v851 = vrot.slane %v839, 1
    %v854 = vmul.f32 %v850, %v614
    %v855 = vmul.f32 %v851, %v615
    %v856 = vmul.f32 %v837, %v846
    %v857 = vmul.f32 %v839, %v847
    %v858 = vadd.f32 %v854, %v856
    %v859 = vadd.f32 %v855, %v857
    %v860 = vtanh.pop %v858
    %v861 = vtanh.pop %v859
    %v862 = vrot.slane %v837, 3
    %v863 = vrot.slane %v839, 3
    %v866 = vmul.f32 %v862, %v860
    %v867 = vmul.f32 %v863, %v861
    %s868 = scalar_lea.vmem [#allocation2], 2
    %v869 = vld [vmem:[%s868] ss:$8 sm:$0xf]
    %s870 = scalar_lea.vmem [#allocation2], 34
    %v871 = vld [vmem:[%s870] ss:$8 sm:$0xf]
    %v874 = vcombine.low %v866, %v867
    %v876 = vunpack.c.l.s4 1966171168
    %v877 = vunpack.c.0.s8 %v876
    %v878 = vlaneseq
    %v879 = vshrl.u32 %v878, 7
    %v880 = vsub.s32 %v877, %v879
    %v881 = vrot.slane %v874, %v880
    %v883 = vunpack.c.l.s4 1966171168
    %v884 = vunpack.c.0.s8 %v883
    %v885 = vlaneseq
    %v886 = vshrl.u32 %v885, 7
    %v887 = vsub.s32 %v884, %v886
    %v888 = vrot.slane %v881, %v887
    %890 = vmatprep.subr.mxu0 %v170
    %891 = vmatpush1.msra.mxu0 %v169
    %892 = vmatprep.subr.mxu0 %v166
    %893 = vmatpush1.msra.mxu0 %v165
    %894 = vmatprep.subr.mxu0 %v162
    %895 = vmatpush1.msra.mxu0 %v161
    %896 = vmatprep.subr.mxu0 %v158
    %897 = vmatpush1.msra.mxu0 %v157
    %898 = vmatprep.subr.mxu0 %v154
    %899 = vmatpush1.msra.mxu0 %v153
    %900 = vmatprep.subr.mxu0 %v150
    %901 = vmatpush1.msra.mxu0 %v149
    %902 = vmatprep.subr.mxu0 %v146
    %903 = vmatpush1.msra.mxu0 %v145
    %904 = vmatprep.subr.mxu0 %v142
    %905 = vmatpush1.msra.mxu0 %v141
    %906 = vmatprep.subr.mxu0 %v138
    %907 = vmatpush1.msra.mxu0 %v137
    %908 = vmatprep.subr.mxu0 %v134
    %909 = vmatpush1.msra.mxu0 %v133
    %910 = vmatprep.subr.mxu0 %v130
    %911 = vmatpush1.msra.mxu0 %v129
    %912 = vmatprep.subr.mxu0 %v126
    %913 = vmatpush1.msra.mxu0 %v125
    %914 = vmatprep.subr.mxu0 %v122
    %915 = vmatpush1.msra.mxu0 %v121
    %916 = vmatprep.subr.mxu0 %v118
    %917 = vmatpush1.msra.mxu0 %v117
    %918 = vmatprep.subr.mxu0 %v114
    %919 = vmatpush1.msra.mxu0 %v113
    %920 = vmatprep.subr.mxu0 %v110
    %921 = vmatpush1.msra.mxu0 %v109
    %922 = vmatprep.subr.mxu0 0.0
    %923 = vmatpush2.msra.mxu0 0.0
    %924 = vmatprep.subr.mxu0 0.0
    %925 = vmatpush2.msra.mxu0 0.0
    %926 = vmatprep.subr.mxu0 0.0
    %927 = vmatpush2.msra.mxu0 0.0
    %928 = vmatprep.subr.mxu0 0.0
    %929 = vmatpush2.msra.mxu0 0.0
    %930 = vmatprep.subr.mxu0 0.0
    %931 = vmatpush2.msra.mxu0 0.0
    %932 = vmatprep.subr.mxu0 0.0
    %933 = vmatpush2.msra.mxu0 0.0
    %934 = vmatprep.subr.mxu0 0.0
    %935 = vmatpush2.msra.mxu0 0.0
    %936 = vmatprep.subr.mxu0 0.0
    %937 = vmatpush2.msra.mxu0 0.0
    %938 = vmatprep.subr.mxu0 0.0
    %939 = vmatpush2.msra.mxu0 0.0
    %940 = vmatprep.subr.mxu0 0.0
    %941 = vmatpush2.msra.mxu0 0.0
    %942 = vmatprep.subr.mxu0 0.0
    %943 = vmatpush2.msra.mxu0 0.0
    %944 = vmatprep.subr.mxu0 0.0
    %945 = vmatpush2.msra.mxu0 0.0
    %946 = vmatprep.subr.mxu0 0.0
    %947 = vmatpush2.msra.mxu0 0.0
    %948 = vmatprep.subr.mxu0 0.0
    %949 = vmatpush2.msra.mxu0 0.0
    %950 = vmatprep.subr.mxu0 0.0
    %951 = vmatpush2.msra.mxu0 0.0
    %952 = vmatprep.subr.mxu0 0.0
    %953 = vmatpush2.msra.mxu0 0.0
    %954 = vmatprep.mubr.f32.mxu0 0.0
    %955 = vmatmul.mubr.f32.gmra.mxu0 %v888
    %v956 = vpop.f32.mrf.mxu0
    %v957 = vadd.f32 0.0, %v956
    %v958 = vpop.f32.mrf.mxu0
    %v959 = vadd.f32 0.0, %v958
    %960 = vdwg.mxu0
    %961 = vmatprep.subr.mxu0 %v172
    %962 = vmatpush1.msra.mxu0 %v171
    %963 = vmatprep.subr.mxu0 %v168
    %964 = vmatpush1.msra.mxu0 %v167
    %965 = vmatprep.subr.mxu0 %v164
    %966 = vmatpush1.msra.mxu0 %v163
    %967 = vmatprep.subr.mxu0 %v160
    %968 = vmatpush1.msra.mxu0 %v159
    %969 = vmatprep.subr.mxu0 %v156
    %970 = vmatpush1.msra.mxu0 %v155
    %971 = vmatprep.subr.mxu0 %v152
    %972 = vmatpush1.msra.mxu0 %v151
    %973 = vmatprep.subr.mxu0 %v148
    %974 = vmatpush1.msra.mxu0 %v147
    %975 = vmatprep.subr.mxu0 %v144
    %976 = vmatpush1.msra.mxu0 %v143
    %977 = vmatprep.subr.mxu0 %v140
    %978 = vmatpush1.msra.mxu0 %v139
    %979 = vmatprep.subr.mxu0 %v136
    %980 = vmatpush1.msra.mxu0 %v135
    %981 = vmatprep.subr.mxu0 %v132
    %982 = vmatpush1.msra.mxu0 %v131
    %983 = vmatprep.subr.mxu0 %v128
    %984 = vmatpush1.msra.mxu0 %v127
    %985 = vmatprep.subr.mxu0 %v124
    %986 = vmatpush1.msra.mxu0 %v123
    %987 = vmatprep.subr.mxu0 %v120
    %988 = vmatpush1.msra.mxu0 %v119
    %989 = vmatprep.subr.mxu0 %v116
    %990 = vmatpush1.msra.mxu0 %v115
    %991 = vmatprep.subr.mxu0 %v112
    %992 = vmatpush1.msra.mxu0 %v111
    %993 = vmatprep.subr.mxu0 0.0
    %994 = vmatpush2.msra.mxu0 0.0
    %995 = vmatprep.subr.mxu0 0.0
    %996 = vmatpush2.msra.mxu0 0.0
    %997 = vmatprep.subr.mxu0 0.0
    %998 = vmatpush2.msra.mxu0 0.0
    %999 = vmatprep.subr.mxu0 0.0
    %1000 = vmatpush2.msra.mxu0 0.0
    %1001 = vmatprep.subr.mxu0 0.0
    %1002 = vmatpush2.msra.mxu0 0.0
    %1003 = vmatprep.subr.mxu0 0.0
    %1004 = vmatpush2.msra.mxu0 0.0
    %1005 = vmatprep.subr.mxu0 0.0
    %1006 = vmatpush2.msra.mxu0 0.0
    %1007 = vmatprep.subr.mxu0 0.0
    %1008 = vmatpush2.msra.mxu0 0.0
    %1009 = vmatprep.subr.mxu0 0.0
    %1010 = vmatpush2.msra.mxu0 0.0
    %1011 = vmatprep.subr.mxu0 0.0
    %1012 = vmatpush2.msra.mxu0 0.0
    %1013 = vmatprep.subr.mxu0 0.0
    %1014 = vmatpush2.msra.mxu0 0.0
    %1015 = vmatprep.subr.mxu0 0.0
    %1016 = vmatpush2.msra.mxu0 0.0
    %1017 = vmatprep.subr.mxu0 0.0
    %1018 = vmatpush2.msra.mxu0 0.0
    %1019 = vmatprep.subr.mxu0 0.0
    %1020 = vmatpush2.msra.mxu0 0.0
    %1021 = vmatprep.subr.mxu0 0.0
    %1022 = vmatpush2.msra.mxu0 0.0
    %1023 = vmatprep.subr.mxu0 0.0
    %1024 = vmatpush2.msra.mxu0 0.0
    %1025 = vmatprep.mubr.f32.mxu0 0.0
    %1026 = vmatmul.mubr.f32.gmra.mxu0 %v888
    %v1027 = vpop.f32.mrf.mxu0
    %v1028 = vadd.f32 0.0, %v1027
    %v1029 = vpop.f32.mrf.mxu0
    %v1030 = vadd.f32 0.0, %v1029
    %1031 = vdwg.mxu0
    %v1036 = vcombine.low %v957, %v959
    %v1037 = vcombine.low %v1028, %v1030
    %v1039 = vunpack.c.l.s4 1966171168
    %v1040 = vunpack.c.0.s8 %v1039
    %v1041 = vlaneseq
    %v1042 = vshrl.u32 %v1041, 7
    %v1043 = vsub.s32 %v1040, %v1042
    %v1044 = vrot.slane %v1036, %v1043
    %v1046 = vunpack.c.l.s4 1966171168
    %v1047 = vunpack.c.0.s8 %v1046
    %v1048 = vlaneseq
    %v1049 = vshrl.u32 %v1048, 7
    %v1050 = vsub.s32 %v1047, %v1049
    %v1051 = vrot.slane %v1037, %v1050
    %v1052 = vcombine.low %v1044, %v1051
    %v1053 = vcombine.high %v1044, %v1051
    %v1055 = vunpack.c.l.s4 1966171168
    %v1056 = vunpack.c.0.s8 %v1055
    %v1057 = vlaneseq
    %v1058 = vshrl.u32 %v1057, 7
    %v1059 = vsub.s32 %v1056, %v1058
    %v1060 = vrot.slane %v1052, %v1059
    %v1062 = vunpack.c.l.s4 1966171168
    %v1063 = vunpack.c.0.s8 %v1062
    %v1064 = vlaneseq
    %v1065 = vshrl.u32 %v1064, 7
    %v1066 = vsub.s32 %v1063, %v1065
    %v1067 = vrot.slane %v1053, %v1066
    %v1070 = vadd.f32 %v869, %v1060
    %v1071 = vadd.f32 %v871, %v1067
    %v1072 = vxor.u32 %v1070, 2147483648
    %v1073 = vxor.u32 %v1071, 2147483648
    %v1074 = vmul.f32 %v1072, 1.442695
    %v1075 = vpow.pop %v1074
    %v1076 = vmul.f32 %v1073, 1.442695
    %v1077 = vpow.pop %v1076
    %v1078 = vadd.f32 %v1075, 1.0
    %v1079 = vadd.f32 %v1077, 1.0
    %v1080 = vrcp.pop %v1078
    %v1081 = vmul.f32 1.0, %v1080
    %v1082 = vrcp.pop %v1079
    %v1083 = vmul.f32 1.0, %v1082
    %v1086 = vrot.slane %v1070, 2
    %v1087 = vrot.slane %v1071, 2
    %v1090 = vtanh.pop %v1086
    %v1091 = vtanh.pop %v1087
    %v1094 = vrot.slane %v1081, 1
    %v1095 = vrot.slane %v1083, 1
    %v1098 = vmul.f32 %v1094, %v858
    %v1099 = vmul.f32 %v1095, %v859
    %v1100 = vmul.f32 %v1081, %v1090
    %v1101 = vmul.f32 %v1083, %v1091
    %v1102 = vadd.f32 %v1098, %v1100
    %v1103 = vadd.f32 %v1099, %v1101
    %v1104 = vtanh.pop %v1102
    %v1105 = vtanh.pop %v1103
    %v1106 = vrot.slane %v1081, 3
    %v1107 = vrot.slane %v1083, 3
    %v1110 = vmul.f32 %v1106, %v1104
    %v1111 = vmul.f32 %v1107, %v1105
    %s1112 = scalar_lea.vmem [#allocation2], 3
    %v1113 = vld [vmem:[%s1112] ss:$8 sm:$0xf]
    %s1114 = scalar_lea.vmem [#allocation2], 35
    %v1115 = vld [vmem:[%s1114] ss:$8 sm:$0xf]
    %v1118 = vcombine.low %v1110, %v1111
    %v1120 = vunpack.c.l.s4 1966171168
    %v1121 = vunpack.c.0.s8 %v1120
    %v1122 = vlaneseq
    %v1123 = vshrl.u32 %v1122, 7
    %v1124 = vsub.s32 %v1121, %v1123
    %v1125 = vrot.slane %v1118, %v1124
    %v1127 = vunpack.c.l.s4 1966171168
    %v1128 = vunpack.c.0.s8 %v1127
    %v1129 = vlaneseq
    %v1130 = vshrl.u32 %v1129, 7
    %v1131 = vsub.s32 %v1128, %v1130
    %v1132 = vrot.slane %v1125, %v1131
    %1134 = vmatprep.subr.mxu0 %v170
    %1135 = vmatpush1.msra.mxu0 %v169
    %1136 = vmatprep.subr.mxu0 %v166
    %1137 = vmatpush1.msra.mxu0 %v165
    %1138 = vmatprep.subr.mxu0 %v162
    %1139 = vmatpush1.msra.mxu0 %v161
    %1140 = vmatprep.subr.mxu0 %v158
    %1141 = vmatpush1.msra.mxu0 %v157
    %1142 = vmatprep.subr.mxu0 %v154
    %1143 = vmatpush1.msra.mxu0 %v153
    %1144 = vmatprep.subr.mxu0 %v150
    %1145 = vmatpush1.msra.mxu0 %v149
    %1146 = vmatprep.subr.mxu0 %v146
    %1147 = vmatpush1.msra.mxu0 %v145
    %1148 = vmatprep.subr.mxu0 %v142
    %1149 = vmatpush1.msra.mxu0 %v141
    %1150 = vmatprep.subr.mxu0 %v138
    %1151 = vmatpush1.msra.mxu0 %v137
    %1152 = vmatprep.subr.mxu0 %v134
    %1153 = vmatpush1.msra.mxu0 %v133
    %1154 = vmatprep.subr.mxu0 %v130
    %1155 = vmatpush1.msra.mxu0 %v129
    %1156 = vmatprep.subr.mxu0 %v126
    %1157 = vmatpush1.msra.mxu0 %v125
    %1158 = vmatprep.subr.mxu0 %v122
    %1159 = vmatpush1.msra.mxu0 %v121
    %1160 = vmatprep.subr.mxu0 %v118
    %1161 = vmatpush1.msra.mxu0 %v117
    %1162 = vmatprep.subr.mxu0 %v114
    %1163 = vmatpush1.msra.mxu0 %v113
    %1164 = vmatprep.subr.mxu0 %v110
    %1165 = vmatpush1.msra.mxu0 %v109
    %1166 = vmatprep.subr.mxu0 0.0
    %1167 = vmatpush2.msra.mxu0 0.0
    %1168 = vmatprep.subr.mxu0 0.0
    %1169 = vmatpush2.msra.mxu0 0.0
    %1170 = vmatprep.subr.mxu0 0.0
    %1171 = vmatpush2.msra.mxu0 0.0
    %1172 = vmatprep.subr.mxu0 0.0
    %1173 = vmatpush2.msra.mxu0 0.0
    %1174 = vmatprep.subr.mxu0 0.0
    %1175 = vmatpush2.msra.mxu0 0.0
    %1176 = vmatprep.subr.mxu0 0.0
    %1177 = vmatpush2.msra.mxu0 0.0
    %1178 = vmatprep.subr.mxu0 0.0
    %1179 = vmatpush2.msra.mxu0 0.0
    %1180 = vmatprep.subr.mxu0 0.0
    %1181 = vmatpush2.msra.mxu0 0.0
    %1182 = vmatprep.subr.mxu0 0.0
    %1183 = vmatpush2.msra.mxu0 0.0
    %1184 = vmatprep.subr.mxu0 0.0
    %1185 = vmatpush2.msra.mxu0 0.0
    %1186 = vmatprep.subr.mxu0 0.0
    %1187 = vmatpush2.msra.mxu0 0.0
    %1188 = vmatprep.subr.mxu0 0.0
    %1189 = vmatpush2.msra.mxu0 0.0
    %1190 = vmatprep.subr.mxu0 0.0
    %1191 = vmatpush2.msra.mxu0 0.0
    %1192 = vmatprep.subr.mxu0 0.0
    %1193 = vmatpush2.msra.mxu0 0.0
    %1194 = vmatprep.subr.mxu0 0.0
    %1195 = vmatpush2.msra.mxu0 0.0
    %1196 = vmatprep.subr.mxu0 0.0
    %1197 = vmatpush2.msra.mxu0 0.0
    %1198 = vmatprep.mubr.f32.mxu0 0.0
    %1199 = vmatmul.mubr.f32.gmra.mxu0 %v1132
    %v1200 = vpop.f32.mrf.mxu0
    %v1201 = vadd.f32 0.0, %v1200
    %v1202 = vpop.f32.mrf.mxu0
    %v1203 = vadd.f32 0.0, %v1202
    %1204 = vdwg.mxu0
    %1205 = vmatprep.subr.mxu0 %v172
    %1206 = vmatpush1.msra.mxu0 %v171
    %1207 = vmatprep.subr.mxu0 %v168
    %1208 = vmatpush1.msra.mxu0 %v167
    %1209 = vmatprep.subr.mxu0 %v164
    %1210 = vmatpush1.msra.mxu0 %v163
    %1211 = vmatprep.subr.mxu0 %v160
    %1212 = vmatpush1.msra.mxu0 %v159
    %1213 = vmatprep.subr.mxu0 %v156
    %1214 = vmatpush1.msra.mxu0 %v155
    %1215 = vmatprep.subr.mxu0 %v152
    %1216 = vmatpush1.msra.mxu0 %v151
    %1217 = vmatprep.subr.mxu0 %v148
    %1218 = vmatpush1.msra.mxu0 %v147
    %1219 = vmatprep.subr.mxu0 %v144
    %1220 = vmatpush1.msra.mxu0 %v143
    %1221 = vmatprep.subr.mxu0 %v140
    %1222 = vmatpush1.msra.mxu0 %v139
    %1223 = vmatprep.subr.mxu0 %v136
    %1224 = vmatpush1.msra.mxu0 %v135
    %1225 = vmatprep.subr.mxu0 %v132
    %1226 = vmatpush1.msra.mxu0 %v131
    %1227 = vmatprep.subr.mxu0 %v128
    %1228 = vmatpush1.msra.mxu0 %v127
    %1229 = vmatprep.subr.mxu0 %v124
    %1230 = vmatpush1.msra.mxu0 %v123
    %1231 = vmatprep.subr.mxu0 %v120
    %1232 = vmatpush1.msra.mxu0 %v119
    %1233 = vmatprep.subr.mxu0 %v116
    %1234 = vmatpush1.msra.mxu0 %v115
    %1235 = vmatprep.subr.mxu0 %v112
    %1236 = vmatpush1.msra.mxu0 %v111
    %1237 = vmatprep.subr.mxu0 0.0
    %1238 = vmatpush2.msra.mxu0 0.0
    %1239 = vmatprep.subr.mxu0 0.0
    %1240 = vmatpush2.msra.mxu0 0.0
    %1241 = vmatprep.subr.mxu0 0.0
    %1242 = vmatpush2.msra.mxu0 0.0
    %1243 = vmatprep.subr.mxu0 0.0
    %1244 = vmatpush2.msra.mxu0 0.0
    %1245 = vmatprep.subr.mxu0 0.0
    %1246 = vmatpush2.msra.mxu0 0.0
    %1247 = vmatprep.subr.mxu0 0.0
    %1248 = vmatpush2.msra.mxu0 0.0
    %1249 = vmatprep.subr.mxu0 0.0
    %1250 = vmatpush2.msra.mxu0 0.0
    %1251 = vmatprep.subr.mxu0 0.0
    %1252 = vmatpush2.msra.mxu0 0.0
    %1253 = vmatprep.subr.mxu0 0.0
    %1254 = vmatpush2.msra.mxu0 0.0
    %1255 = vmatprep.subr.mxu0 0.0
    %1256 = vmatpush2.msra.mxu0 0.0
    %1257 = vmatprep.subr.mxu0 0.0
    %1258 = vmatpush2.msra.mxu0 0.0
    %1259 = vmatprep.subr.mxu0 0.0
    %1260 = vmatpush2.msra.mxu0 0.0
    %1261 = vmatprep.subr.mxu0 0.0
    %1262 = vmatpush2.msra.mxu0 0.0
    %1263 = vmatprep.subr.mxu0 0.0
    %1264 = vmatpush2.msra.mxu0 0.0
    %1265 = vmatprep.subr.mxu0 0.0
    %1266 = vmatpush2.msra.mxu0 0.0
    %1267 = vmatprep.subr.mxu0 0.0
    %1268 = vmatpush2.msra.mxu0 0.0
    %1269 = vmatprep.mubr.f32.mxu0 0.0
    %1270 = vmatmul.mubr.f32.gmra.mxu0 %v1132
    %v1271 = vpop.f32.mrf.mxu0
    %v1272 = vadd.f32 0.0, %v1271
    %v1273 = vpop.f32.mrf.mxu0
    %v1274 = vadd.f32 0.0, %v1273
    %1275 = vdwg.mxu0
    %v1280 = vcombine.low %v1201, %v1203
    %v1281 = vcombine.low %v1272, %v1274
    %v1283 = vunpack.c.l.s4 1966171168
    %v1284 = vunpack.c.0.s8 %v1283
    %v1285 = vlaneseq
    %v1286 = vshrl.u32 %v1285, 7
    %v1287 = vsub.s32 %v1284, %v1286
    %v1288 = vrot.slane %v1280, %v1287
    %v1290 = vunpack.c.l.s4 1966171168
    %v1291 = vunpack.c.0.s8 %v1290
    %v1292 = vlaneseq
    %v1293 = vshrl.u32 %v1292, 7
    %v1294 = vsub.s32 %v1291, %v1293
    %v1295 = vrot.slane %v1281, %v1294
    %v1296 = vcombine.low %v1288, %v1295
    %v1297 = vcombine.high %v1288, %v1295
    %v1299 = vunpack.c.l.s4 1966171168
    %v1300 = vunpack.c.0.s8 %v1299
    %v1301 = vlaneseq
    %v1302 = vshrl.u32 %v1301, 7
    %v1303 = vsub.s32 %v1300, %v1302
    %v1304 = vrot.slane %v1296, %v1303
    %v1306 = vunpack.c.l.s4 1966171168
    %v1307 = vunpack.c.0.s8 %v1306
    %v1308 = vlaneseq
    %v1309 = vshrl.u32 %v1308, 7
    %v1310 = vsub.s32 %v1307, %v1309
    %v1311 = vrot.slane %v1297, %v1310
    %v1314 = vadd.f32 %v1113, %v1304
    %v1315 = vadd.f32 %v1115, %v1311
    %v1316 = vxor.u32 %v1314, 2147483648
    %v1317 = vxor.u32 %v1315, 2147483648
    %v1318 = vmul.f32 %v1316, 1.442695
    %v1319 = vpow.pop %v1318
    %v1320 = vmul.f32 %v1317, 1.442695
    %v1321 = vpow.pop %v1320
    %v1322 = vadd.f32 %v1319, 1.0
    %v1323 = vadd.f32 %v1321, 1.0
    %v1324 = vrcp.pop %v1322
    %v1325 = vmul.f32 1.0, %v1324
    %v1326 = vrcp.pop %v1323
    %v1327 = vmul.f32 1.0, %v1326
    %v1330 = vrot.slane %v1314, 2
    %v1331 = vrot.slane %v1315, 2
    %v1334 = vtanh.pop %v1330
    %v1335 = vtanh.pop %v1331
    %v1338 = vrot.slane %v1325, 1
    %v1339 = vrot.slane %v1327, 1
    %v1342 = vmul.f32 %v1338, %v1102
    %v1343 = vmul.f32 %v1339, %v1103
    %v1344 = vmul.f32 %v1325, %v1334
    %v1345 = vmul.f32 %v1327, %v1335
    %v1346 = vadd.f32 %v1342, %v1344
    %v1347 = vadd.f32 %v1343, %v1345
    %v1348 = vtanh.pop %v1346
    %v1349 = vtanh.pop %v1347
    %v1350 = vrot.slane %v1325, 3
    %v1351 = vrot.slane %v1327, 3
    %v1354 = vmul.f32 %v1350, %v1348
    %v1355 = vmul.f32 %v1351, %v1349
    %s1356 = scalar_lea.vmem [#allocation2], 4
    %v1357 = vld [vmem:[%s1356] ss:$8 sm:$0xf]
    %s1358 = scalar_lea.vmem [#allocation2], 36
    %v1359 = vld [vmem:[%s1358] ss:$8 sm:$0xf]
    %v1362 = vcombine.low %v1354, %v1355
    %v1364 = vunpack.c.l.s4 1966171168
    %v1365 = vunpack.c.0.s8 %v1364
    %v1366 = vlaneseq
    %v1367 = vshrl.u32 %v1366, 7
    %v1368 = vsub.s32 %v1365, %v1367
    %v1369 = vrot.slane %v1362, %v1368
    %v1371 = vunpack.c.l.s4 1966171168
    %v1372 = vunpack.c.0.s8 %v1371
    %v1373 = vlaneseq
    %v1374 = vshrl.u32 %v1373, 7
    %v1375 = vsub.s32 %v1372, %v1374
    %v1376 = vrot.slane %v1369, %v1375
    %1378 = vmatprep.subr.mxu0 %v170
    %1379 = vmatpush1.msra.mxu0 %v169
    %1380 = vmatprep.subr.mxu0 %v166
    %1381 = vmatpush1.msra.mxu0 %v165
    %1382 = vmatprep.subr.mxu0 %v162
    %1383 = vmatpush1.msra.mxu0 %v161
    %1384 = vmatprep.subr.mxu0 %v158
    %1385 = vmatpush1.msra.mxu0 %v157
    %1386 = vmatprep.subr.mxu0 %v154
    %1387 = vmatpush1.msra.mxu0 %v153
    %1388 = vmatprep.subr.mxu0 %v150
    %1389 = vmatpush1.msra.mxu0 %v149
    %1390 = vmatprep.subr.mxu0 %v146
    %1391 = vmatpush1.msra.mxu0 %v145
    %1392 = vmatprep.subr.mxu0 %v142
    %1393 = vmatpush1.msra.mxu0 %v141
    %1394 = vmatprep.subr.mxu0 %v138
    %1395 = vmatpush1.msra.mxu0 %v137
    %1396 = vmatprep.subr.mxu0 %v134
    %1397 = vmatpush1.msra.mxu0 %v133
    %1398 = vmatprep.subr.mxu0 %v130
    %1399 = vmatpush1.msra.mxu0 %v129
    %1400 = vmatprep.subr.mxu0 %v126
    %1401 = vmatpush1.msra.mxu0 %v125
    %1402 = vmatprep.subr.mxu0 %v122
    %1403 = vmatpush1.msra.mxu0 %v121
    %1404 = vmatprep.subr.mxu0 %v118
    %1405 = vmatpush1.msra.mxu0 %v117
    %1406 = vmatprep.subr.mxu0 %v114
    %1407 = vmatpush1.msra.mxu0 %v113
    %1408 = vmatprep.subr.mxu0 %v110
    %1409 = vmatpush1.msra.mxu0 %v109
    %1410 = vmatprep.subr.mxu0 0.0
    %1411 = vmatpush2.msra.mxu0 0.0
    %1412 = vmatprep.subr.mxu0 0.0
    %1413 = vmatpush2.msra.mxu0 0.0
    %1414 = vmatprep.subr.mxu0 0.0
    %1415 = vmatpush2.msra.mxu0 0.0
    %1416 = vmatprep.subr.mxu0 0.0
    %1417 = vmatpush2.msra.mxu0 0.0
    %1418 = vmatprep.subr.mxu0 0.0
    %1419 = vmatpush2.msra.mxu0 0.0
    %1420 = vmatprep.subr.mxu0 0.0
    %1421 = vmatpush2.msra.mxu0 0.0
    %1422 = vmatprep.subr.mxu0 0.0
    %1423 = vmatpush2.msra.mxu0 0.0
    %1424 = vmatprep.subr.mxu0 0.0
    %1425 = vmatpush2.msra.mxu0 0.0
    %1426 = vmatprep.subr.mxu0 0.0
    %1427 = vmatpush2.msra.mxu0 0.0
    %1428 = vmatprep.subr.mxu0 0.0
    %1429 = vmatpush2.msra.mxu0 0.0
    %1430 = vmatprep.subr.mxu0 0.0
    %1431 = vmatpush2.msra.mxu0 0.0
    %1432 = vmatprep.subr.mxu0 0.0
    %1433 = vmatpush2.msra.mxu0 0.0
    %1434 = vmatprep.subr.mxu0 0.0
    %1435 = vmatpush2.msra.mxu0 0.0
    %1436 = vmatprep.subr.mxu0 0.0
    %1437 = vmatpush2.msra.mxu0 0.0
    %1438 = vmatprep.subr.mxu0 0.0
    %1439 = vmatpush2.msra.mxu0 0.0
    %1440 = vmatprep.subr.mxu0 0.0
    %1441 = vmatpush2.msra.mxu0 0.0
    %1442 = vmatprep.mubr.f32.mxu0 0.0
    %1443 = vmatmul.mubr.f32.gmra.mxu0 %v1376
    %v1444 = vpop.f32.mrf.mxu0
    %v1445 = vadd.f32 0.0, %v1444
    %v1446 = vpop.f32.mrf.mxu0
    %v1447 = vadd.f32 0.0, %v1446
    %1448 = vdwg.mxu0
    %1449 = vmatprep.subr.mxu0 %v172
    %1450 = vmatpush1.msra.mxu0 %v171
    %1451 = vmatprep.subr.mxu0 %v168
    %1452 = vmatpush1.msra.mxu0 %v167
    %1453 = vmatprep.subr.mxu0 %v164
    %1454 = vmatpush1.msra.mxu0 %v163
    %1455 = vmatprep.subr.mxu0 %v160
    %1456 = vmatpush1.msra.mxu0 %v159
    %1457 = vmatprep.subr.mxu0 %v156
    %1458 = vmatpush1.msra.mxu0 %v155
    %1459 = vmatprep.subr.mxu0 %v152
    %1460 = vmatpush1.msra.mxu0 %v151
    %1461 = vmatprep.subr.mxu0 %v148
    %1462 = vmatpush1.msra.mxu0 %v147
    %1463 = vmatprep.subr.mxu0 %v144
    %1464 = vmatpush1.msra.mxu0 %v143
    %1465 = vmatprep.subr.mxu0 %v140
    %1466 = vmatpush1.msra.mxu0 %v139
    %1467 = vmatprep.subr.mxu0 %v136
    %1468 = vmatpush1.msra.mxu0 %v135
    %1469 = vmatprep.subr.mxu0 %v132
    %1470 = vmatpush1.msra.mxu0 %v131
    %1471 = vmatprep.subr.mxu0 %v128
    %1472 = vmatpush1.msra.mxu0 %v127
    %1473 = vmatprep.subr.mxu0 %v124
    %1474 = vmatpush1.msra.mxu0 %v123
    %1475 = vmatprep.subr.mxu0 %v120
    %1476 = vmatpush1.msra.mxu0 %v119
    %1477 = vmatprep.subr.mxu0 %v116
    %1478 = vmatpush1.msra.mxu0 %v115
    %1479 = vmatprep.subr.mxu0 %v112
    %1480 = vmatpush1.msra.mxu0 %v111
    %1481 = vmatprep.subr.mxu0 0.0
    %1482 = vmatpush2.msra.mxu0 0.0
    %1483 = vmatprep.subr.mxu0 0.0
    %1484 = vmatpush2.msra.mxu0 0.0
    %1485 = vmatprep.subr.mxu0 0.0
    %1486 = vmatpush2.msra.mxu0 0.0
    %1487 = vmatprep.subr.mxu0 0.0
    %1488 = vmatpush2.msra.mxu0 0.0
    %1489 = vmatprep.subr.mxu0 0.0
    %1490 = vmatpush2.msra.mxu0 0.0
    %1491 = vmatprep.subr.mxu0 0.0
    %1492 = vmatpush2.msra.mxu0 0.0
    %1493 = vmatprep.subr.mxu0 0.0
    %1494 = vmatpush2.msra.mxu0 0.0
    %1495 = vmatprep.subr.mxu0 0.0
    %1496 = vmatpush2.msra.mxu0 0.0
    %1497 = vmatprep.subr.mxu0 0.0
    %1498 = vmatpush2.msra.mxu0 0.0
    %1499 = vmatprep.subr.mxu0 0.0
    %1500 = vmatpush2.msra.mxu0 0.0
    %1501 = vmatprep.subr.mxu0 0.0
    %1502 = vmatpush2.msra.mxu0 0.0
    %1503 = vmatprep.subr.mxu0 0.0
    %1504 = vmatpush2.msra.mxu0 0.0
    %1505 = vmatprep.subr.mxu0 0.0
    %1506 = vmatpush2.msra.mxu0 0.0
    %1507 = vmatprep.subr.mxu0 0.0
    %1508 = vmatpush2.msra.mxu0 0.0
    %1509 = vmatprep.subr.mxu0 0.0
    %1510 = vmatpush2.msra.mxu0 0.0
    %1511 = vmatprep.subr.mxu0 0.0
    %1512 = vmatpush2.msra.mxu0 0.0
    %1513 = vmatprep.mubr.f32.mxu0 0.0
    %1514 = vmatmul.mubr.f32.gmra.mxu0 %v1376
    %v1515 = vpop.f32.mrf.mxu0
    %v1516 = vadd.f32 0.0, %v1515
    %v1517 = vpop.f32.mrf.mxu0
    %v1518 = vadd.f32 0.0, %v1517
    %1519 = vdwg.mxu0
    %v1524 = vcombine.low %v1445, %v1447
    %v1525 = vcombine.low %v1516, %v1518
    %v1527 = vunpack.c.l.s4 1966171168
    %v1528 = vunpack.c.0.s8 %v1527
    %v1529 = vlaneseq
    %v1530 = vshrl.u32 %v1529, 7
    %v1531 = vsub.s32 %v1528, %v1530
    %v1532 = vrot.slane %v1524, %v1531
    %v1534 = vunpack.c.l.s4 1966171168
    %v1535 = vunpack.c.0.s8 %v1534
    %v1536 = vlaneseq
    %v1537 = vshrl.u32 %v1536, 7
    %v1538 = vsub.s32 %v1535, %v1537
    %v1539 = vrot.slane %v1525, %v1538
    %v1540 = vcombine.low %v1532, %v1539
    %v1541 = vcombine.high %v1532, %v1539
    %v1543 = vunpack.c.l.s4 1966171168
    %v1544 = vunpack.c.0.s8 %v1543
    %v1545 = vlaneseq
    %v1546 = vshrl.u32 %v1545, 7
    %v1547 = vsub.s32 %v1544, %v1546
    %v1548 = vrot.slane %v1540, %v1547
    %v1550 = vunpack.c.l.s4 1966171168
    %v1551 = vunpack.c.0.s8 %v1550
    %v1552 = vlaneseq
    %v1553 = vshrl.u32 %v1552, 7
    %v1554 = vsub.s32 %v1551, %v1553
    %v1555 = vrot.slane %v1541, %v1554
    %v1558 = vadd.f32 %v1357, %v1548
    %v1559 = vadd.f32 %v1359, %v1555
    %v1560 = vxor.u32 %v1558, 2147483648
    %v1561 = vxor.u32 %v1559, 2147483648
    %v1562 = vmul.f32 %v1560, 1.442695
    %v1563 = vpow.pop %v1562
    %v1564 = vmul.f32 %v1561, 1.442695
    %v1565 = vpow.pop %v1564
    %v1566 = vadd.f32 %v1563, 1.0
    %v1567 = vadd.f32 %v1565, 1.0
    %v1568 = vrcp.pop %v1566
    %v1569 = vmul.f32 1.0, %v1568
    %v1570 = vrcp.pop %v1567
    %v1571 = vmul.f32 1.0, %v1570
    %v1574 = vrot.slane %v1558, 2
    %v1575 = vrot.slane %v1559, 2
    %v1578 = vtanh.pop %v1574
    %v1579 = vtanh.pop %v1575
    %v1582 = vrot.slane %v1569, 1
    %v1583 = vrot.slane %v1571, 1
    %v1586 = vmul.f32 %v1582, %v1346
    %v1587 = vmul.f32 %v1583, %v1347
    %v1588 = vmul.f32 %v1569, %v1578
    %v1589 = vmul.f32 %v1571, %v1579
    %v1590 = vadd.f32 %v1586, %v1588
    %v1591 = vadd.f32 %v1587, %v1589
    %v1592 = vtanh.pop %v1590
    %v1593 = vtanh.pop %v1591
    %v1594 = vrot.slane %v1569, 3
    %v1595 = vrot.slane %v1571, 3
    %v1598 = vmul.f32 %v1594, %v1592
    %v1599 = vmul.f32 %v1595, %v1593
    %s1600 = scalar_lea.vmem [#allocation2], 5
    %v1601 = vld [vmem:[%s1600] ss:$8 sm:$0xf]
    %s1602 = scalar_lea.vmem [#allocation2], 37
    %v1603 = vld [vmem:[%s1602] ss:$8 sm:$0xf]
    %v1606 = vcombine.low %v1598, %v1599
    %v1608 = vunpack.c.l.s4 1966171168
    %v1609 = vunpack.c.0.s8 %v1608
    %v1610 = vlaneseq
    %v1611 = vshrl.u32 %v1610, 7
    %v1612 = vsub.s32 %v1609, %v1611
    %v1613 = vrot.slane %v1606, %v1612
    %v1615 = vunpack.c.l.s4 1966171168
    %v1616 = vunpack.c.0.s8 %v1615
    %v1617 = vlaneseq
    %v1618 = vshrl.u32 %v1617, 7
    %v1619 = vsub.s32 %v1616, %v1618
    %v1620 = vrot.slane %v1613, %v1619
    %1622 = vmatprep.subr.mxu0 %v170
    %1623 = vmatpush1.msra.mxu0 %v169
    %1624 = vmatprep.subr.mxu0 %v166
    %1625 = vmatpush1.msra.mxu0 %v165
    %1626 = vmatprep.subr.mxu0 %v162
    %1627 = vmatpush1.msra.mxu0 %v161
    %1628 = vmatprep.subr.mxu0 %v158
    %1629 = vmatpush1.msra.mxu0 %v157
    %1630 = vmatprep.subr.mxu0 %v154
    %1631 = vmatpush1.msra.mxu0 %v153
    %1632 = vmatprep.subr.mxu0 %v150
    %1633 = vmatpush1.msra.mxu0 %v149
    %1634 = vmatprep.subr.mxu0 %v146
    %1635 = vmatpush1.msra.mxu0 %v145
    %1636 = vmatprep.subr.mxu0 %v142
    %1637 = vmatpush1.msra.mxu0 %v141
    %1638 = vmatprep.subr.mxu0 %v138
    %1639 = vmatpush1.msra.mxu0 %v137
    %1640 = vmatprep.subr.mxu0 %v134
    %1641 = vmatpush1.msra.mxu0 %v133
    %1642 = vmatprep.subr.mxu0 %v130
    %1643 = vmatpush1.msra.mxu0 %v129
    %1644 = vmatprep.subr.mxu0 %v126
    %1645 = vmatpush1.msra.mxu0 %v125
    %1646 = vmatprep.subr.mxu0 %v122
    %1647 = vmatpush1.msra.mxu0 %v121
    %1648 = vmatprep.subr.mxu0 %v118
    %1649 = vmatpush1.msra.mxu0 %v117
    %1650 = vmatprep.subr.mxu0 %v114
    %1651 = vmatpush1.msra.mxu0 %v113
    %1652 = vmatprep.subr.mxu0 %v110
    %1653 = vmatpush1.msra.mxu0 %v109
    %1654 = vmatprep.subr.mxu0 0.0
    %1655 = vmatpush2.msra.mxu0 0.0
    %1656 = vmatprep.subr.mxu0 0.0
    %1657 = vmatpush2.msra.mxu0 0.0
    %1658 = vmatprep.subr.mxu0 0.0
    %1659 = vmatpush2.msra.mxu0 0.0
    %1660 = vmatprep.subr.mxu0 0.0
    %1661 = vmatpush2.msra.mxu0 0.0
    %1662 = vmatprep.subr.mxu0 0.0
    %1663 = vmatpush2.msra.mxu0 0.0
    %1664 = vmatprep.subr.mxu0 0.0
    %1665 = vmatpush2.msra.mxu0 0.0
    %1666 = vmatprep.subr.mxu0 0.0
    %1667 = vmatpush2.msra.mxu0 0.0
    %1668 = vmatprep.subr.mxu0 0.0
    %1669 = vmatpush2.msra.mxu0 0.0
    %1670 = vmatprep.subr.mxu0 0.0
    %1671 = vmatpush2.msra.mxu0 0.0
    %1672 = vmatprep.subr.mxu0 0.0
    %1673 = vmatpush2.msra.mxu0 0.0
    %1674 = vmatprep.subr.mxu0 0.0
    %1675 = vmatpush2.msra.mxu0 0.0
    %1676 = vmatprep.subr.mxu0 0.0
    %1677 = vmatpush2.msra.mxu0 0.0
    %1678 = vmatprep.subr.mxu0 0.0
    %1679 = vmatpush2.msra.mxu0 0.0
    %1680 = vmatprep.subr.mxu0 0.0
    %1681 = vmatpush2.msra.mxu0 0.0
    %1682 = vmatprep.subr.mxu0 0.0
    %1683 = vmatpush2.msra.mxu0 0.0
    %1684 = vmatprep.subr.mxu0 0.0
    %1685 = vmatpush2.msra.mxu0 0.0
    %1686 = vmatprep.mubr.f32.mxu0 0.0
    %1687 = vmatmul.mubr.f32.gmra.mxu0 %v1620
    %v1688 = vpop.f32.mrf.mxu0
    %v1689 = vadd.f32 0.0, %v1688
    %v1690 = vpop.f32.mrf.mxu0
    %v1691 = vadd.f32 0.0, %v1690
    %1692 = vdwg.mxu0
    %1693 = vmatprep.subr.mxu0 %v172
    %1694 = vmatpush1.msra.mxu0 %v171
    %1695 = vmatprep.subr.mxu0 %v168
    %1696 = vmatpush1.msra.mxu0 %v167
    %1697 = vmatprep.subr.mxu0 %v164
    %1698 = vmatpush1.msra.mxu0 %v163
    %1699 = vmatprep.subr.mxu0 %v160
    %1700 = vmatpush1.msra.mxu0 %v159
    %1701 = vmatprep.subr.mxu0 %v156
    %1702 = vmatpush1.msra.mxu0 %v155
    %1703 = vmatprep.subr.mxu0 %v152
    %1704 = vmatpush1.msra.mxu0 %v151
    %1705 = vmatprep.subr.mxu0 %v148
    %1706 = vmatpush1.msra.mxu0 %v147
    %1707 = vmatprep.subr.mxu0 %v144
    %1708 = vmatpush1.msra.mxu0 %v143
    %1709 = vmatprep.subr.mxu0 %v140
    %1710 = vmatpush1.msra.mxu0 %v139
    %1711 = vmatprep.subr.mxu0 %v136
    %1712 = vmatpush1.msra.mxu0 %v135
    %1713 = vmatprep.subr.mxu0 %v132
    %1714 = vmatpush1.msra.mxu0 %v131
    %1715 = vmatprep.subr.mxu0 %v128
    %1716 = vmatpush1.msra.mxu0 %v127
    %1717 = vmatprep.subr.mxu0 %v124
    %1718 = vmatpush1.msra.mxu0 %v123
    %1719 = vmatprep.subr.mxu0 %v120
    %1720 = vmatpush1.msra.mxu0 %v119
    %1721 = vmatprep.subr.mxu0 %v116
    %1722 = vmatpush1.msra.mxu0 %v115
    %1723 = vmatprep.subr.mxu0 %v112
    %1724 = vmatpush1.msra.mxu0 %v111
    %1725 = vmatprep.subr.mxu0 0.0
    %1726 = vmatpush2.msra.mxu0 0.0
    %1727 = vmatprep.subr.mxu0 0.0
    %1728 = vmatpush2.msra.mxu0 0.0
    %1729 = vmatprep.subr.mxu0 0.0
    %1730 = vmatpush2.msra.mxu0 0.0
    %1731 = vmatprep.subr.mxu0 0.0
    %1732 = vmatpush2.msra.mxu0 0.0
    %1733 = vmatprep.subr.mxu0 0.0
    %1734 = vmatpush2.msra.mxu0 0.0
    %1735 = vmatprep.subr.mxu0 0.0
    %1736 = vmatpush2.msra.mxu0 0.0
    %1737 = vmatprep.subr.mxu0 0.0
    %1738 = vmatpush2.msra.mxu0 0.0
    %1739 = vmatprep.subr.mxu0 0.0
    %1740 = vmatpush2.msra.mxu0 0.0
    %1741 = vmatprep.subr.mxu0 0.0
    %1742 = vmatpush2.msra.mxu0 0.0
    %1743 = vmatprep.subr.mxu0 0.0
    %1744 = vmatpush2.msra.mxu0 0.0
    %1745 = vmatprep.subr.mxu0 0.0
    %1746 = vmatpush2.msra.mxu0 0.0
    %1747 = vmatprep.subr.mxu0 0.0
    %1748 = vmatpush2.msra.mxu0 0.0
    %1749 = vmatprep.subr.mxu0 0.0
    %1750 = vmatpush2.msra.mxu0 0.0
    %1751 = vmatprep.subr.mxu0 0.0
    %1752 = vmatpush2.msra.mxu0 0.0
    %1753 = vmatprep.subr.mxu0 0.0
    %1754 = vmatpush2.msra.mxu0 0.0
    %1755 = vmatprep.subr.mxu0 0.0
    %1756 = vmatpush2.msra.mxu0 0.0
    %1757 = vmatprep.mubr.f32.mxu0 0.0
    %1758 = vmatmul.mubr.f32.gmra.mxu0 %v1620
    %v1759 = vpop.f32.mrf.mxu0
    %v1760 = vadd.f32 0.0, %v1759
    %v1761 = vpop.f32.mrf.mxu0
    %v1762 = vadd.f32 0.0, %v1761
    %1763 = vdwg.mxu0
    %v1768 = vcombine.low %v1689, %v1691
    %v1769 = vcombine.low %v1760, %v1762
    %v1771 = vunpack.c.l.s4 1966171168
    %v1772 = vunpack.c.0.s8 %v1771
    %v1773 = vlaneseq
    %v1774 = vshrl.u32 %v1773, 7
    %v1775 = vsub.s32 %v1772, %v1774
    %v1776 = vrot.slane %v1768, %v1775
    %v1778 = vunpack.c.l.s4 1966171168
    %v1779 = vunpack.c.0.s8 %v1778
    %v1780 = vlaneseq
    %v1781 = vshrl.u32 %v1780, 7
    %v1782 = vsub.s32 %v1779, %v1781
    %v1783 = vrot.slane %v1769, %v1782
    %v1784 = vcombine.low %v1776, %v1783
    %v1785 = vcombine.high %v1776, %v1783
    %v1787 = vunpack.c.l.s4 1966171168
    %v1788 = vunpack.c.0.s8 %v1787
    %v1789 = vlaneseq
    %v1790 = vshrl.u32 %v1789, 7
    %v1791 = vsub.s32 %v1788, %v1790
    %v1792 = vrot.slane %v1784, %v1791
    %v1794 = vunpack.c.l.s4 1966171168
    %v1795 = vunpack.c.0.s8 %v1794
    %v1796 = vlaneseq
    %v1797 = vshrl.u32 %v1796, 7
    %v1798 = vsub.s32 %v1795, %v1797
    %v1799 = vrot.slane %v1785, %v1798
    %v1802 = vadd.f32 %v1601, %v1792
    %v1803 = vadd.f32 %v1603, %v1799
    %v1804 = vxor.u32 %v1802, 2147483648
    %v1805 = vxor.u32 %v1803, 2147483648
    %v1806 = vmul.f32 %v1804, 1.442695
    %v1807 = vpow.pop %v1806
    %v1808 = vmul.f32 %v1805, 1.442695
    %v1809 = vpow.pop %v1808
    %v1810 = vadd.f32 %v1807, 1.0
    %v1811 = vadd.f32 %v1809, 1.0
    %v1812 = vrcp.pop %v1810
    %v1813 = vmul.f32 1.0, %v1812
    %v1814 = vrcp.pop %v1811
    %v1815 = vmul.f32 1.0, %v1814
    %v1818 = vrot.slane %v1802, 2
    %v1819 = vrot.slane %v1803, 2
    %v1822 = vtanh.pop %v1818
    %v1823 = vtanh.pop %v1819
    %v1826 = vrot.slane %v1813, 1
    %v1827 = vrot.slane %v1815, 1
    %v1830 = vmul.f32 %v1826, %v1590
    %v1831 = vmul.f32 %v1827, %v1591
    %v1832 = vmul.f32 %v1813, %v1822
    %v1833 = vmul.f32 %v1815, %v1823
    %v1834 = vadd.f32 %v1830, %v1832
    %v1835 = vadd.f32 %v1831, %v1833
    %v1836 = vtanh.pop %v1834
    %v1837 = vtanh.pop %v1835
    %v1838 = vrot.slane %v1813, 3
    %v1839 = vrot.slane %v1815, 3
    %v1842 = vmul.f32 %v1838, %v1836
    %v1843 = vmul.f32 %v1839, %v1837
    %s1844 = scalar_lea.vmem [#allocation2], 6
    %v1845 = vld [vmem:[%s1844] ss:$8 sm:$0xf]
    %s1846 = scalar_lea.vmem [#allocation2], 38
    %v1847 = vld [vmem:[%s1846] ss:$8 sm:$0xf]
    %v1850 = vcombine.low %v1842, %v1843
    %v1852 = vunpack.c.l.s4 1966171168
    %v1853 = vunpack.c.0.s8 %v1852
    %v1854 = vlaneseq
    %v1855 = vshrl.u32 %v1854, 7
    %v1856 = vsub.s32 %v1853, %v1855
    %v1857 = vrot.slane %v1850, %v1856
    %v1859 = vunpack.c.l.s4 1966171168
    %v1860 = vunpack.c.0.s8 %v1859
    %v1861 = vlaneseq
    %v1862 = vshrl.u32 %v1861, 7
    %v1863 = vsub.s32 %v1860, %v1862
    %v1864 = vrot.slane %v1857, %v1863
    %1866 = vmatprep.subr.mxu0 %v170
    %1867 = vmatpush1.msra.mxu0 %v169
    %1868 = vmatprep.subr.mxu0 %v166
    %1869 = vmatpush1.msra.mxu0 %v165
    %1870 = vmatprep.subr.mxu0 %v162
    %1871 = vmatpush1.msra.mxu0 %v161
    %1872 = vmatprep.subr.mxu0 %v158
    %1873 = vmatpush1.msra.mxu0 %v157
    %1874 = vmatprep.subr.mxu0 %v154
    %1875 = vmatpush1.msra.mxu0 %v153
    %1876 = vmatprep.subr.mxu0 %v150
    %1877 = vmatpush1.msra.mxu0 %v149
    %1878 = vmatprep.subr.mxu0 %v146
    %1879 = vmatpush1.msra.mxu0 %v145
    %1880 = vmatprep.subr.mxu0 %v142
    %1881 = vmatpush1.msra.mxu0 %v141
    %1882 = vmatprep.subr.mxu0 %v138
    %1883 = vmatpush1.msra.mxu0 %v137
    %1884 = vmatprep.subr.mxu0 %v134
    %1885 = vmatpush1.msra.mxu0 %v133
    %1886 = vmatprep.subr.mxu0 %v130
    %1887 = vmatpush1.msra.mxu0 %v129
    %1888 = vmatprep.subr.mxu0 %v126
    %1889 = vmatpush1.msra.mxu0 %v125
    %1890 = vmatprep.subr.mxu0 %v122
    %1891 = vmatpush1.msra.mxu0 %v121
    %1892 = vmatprep.subr.mxu0 %v118
    %1893 = vmatpush1.msra.mxu0 %v117
    %1894 = vmatprep.subr.mxu0 %v114
    %1895 = vmatpush1.msra.mxu0 %v113
    %1896 = vmatprep.subr.mxu0 %v110
    %1897 = vmatpush1.msra.mxu0 %v109
    %1898 = vmatprep.subr.mxu0 0.0
    %1899 = vmatpush2.msra.mxu0 0.0
    %1900 = vmatprep.subr.mxu0 0.0
    %1901 = vmatpush2.msra.mxu0 0.0
    %1902 = vmatprep.subr.mxu0 0.0
    %1903 = vmatpush2.msra.mxu0 0.0
    %1904 = vmatprep.subr.mxu0 0.0
    %1905 = vmatpush2.msra.mxu0 0.0
    %1906 = vmatprep.subr.mxu0 0.0
    %1907 = vmatpush2.msra.mxu0 0.0
    %1908 = vmatprep.subr.mxu0 0.0
    %1909 = vmatpush2.msra.mxu0 0.0
    %1910 = vmatprep.subr.mxu0 0.0
    %1911 = vmatpush2.msra.mxu0 0.0
    %1912 = vmatprep.subr.mxu0 0.0
    %1913 = vmatpush2.msra.mxu0 0.0
    %1914 = vmatprep.subr.mxu0 0.0
    %1915 = vmatpush2.msra.mxu0 0.0
    %1916 = vmatprep.subr.mxu0 0.0
    %1917 = vmatpush2.msra.mxu0 0.0
    %1918 = vmatprep.subr.mxu0 0.0
    %1919 = vmatpush2.msra.mxu0 0.0
    %1920 = vmatprep.subr.mxu0 0.0
    %1921 = vmatpush2.msra.mxu0 0.0
    %1922 = vmatprep.subr.mxu0 0.0
    %1923 = vmatpush2.msra.mxu0 0.0
    %1924 = vmatprep.subr.mxu0 0.0
    %1925 = vmatpush2.msra.mxu0 0.0
    %1926 = vmatprep.subr.mxu0 0.0
    %1927 = vmatpush2.msra.mxu0 0.0
    %1928 = vmatprep.subr.mxu0 0.0
    %1929 = vmatpush2.msra.mxu0 0.0
    %1930 = vmatprep.mubr.f32.mxu0 0.0
    %1931 = vmatmul.mubr.f32.gmra.mxu0 %v1864
    %v1932 = vpop.f32.mrf.mxu0
    %v1933 = vadd.f32 0.0, %v1932
    %v1934 = vpop.f32.mrf.mxu0
    %v1935 = vadd.f32 0.0, %v1934
    %1936 = vdwg.mxu0
    %1937 = vmatprep.subr.mxu0 %v172
    %1938 = vmatpush1.msra.mxu0 %v171
    %1939 = vmatprep.subr.mxu0 %v168
    %1940 = vmatpush1.msra.mxu0 %v167
    %1941 = vmatprep.subr.mxu0 %v164
    %1942 = vmatpush1.msra.mxu0 %v163
    %1943 = vmatprep.subr.mxu0 %v160
    %1944 = vmatpush1.msra.mxu0 %v159
    %1945 = vmatprep.subr.mxu0 %v156
    %1946 = vmatpush1.msra.mxu0 %v155
    %1947 = vmatprep.subr.mxu0 %v152
    %1948 = vmatpush1.msra.mxu0 %v151
    %1949 = vmatprep.subr.mxu0 %v148
    %1950 = vmatpush1.msra.mxu0 %v147
    %1951 = vmatprep.subr.mxu0 %v144
    %1952 = vmatpush1.msra.mxu0 %v143
    %1953 = vmatprep.subr.mxu0 %v140
    %1954 = vmatpush1.msra.mxu0 %v139
    %1955 = vmatprep.subr.mxu0 %v136
    %1956 = vmatpush1.msra.mxu0 %v135
    %1957 = vmatprep.subr.mxu0 %v132
    %1958 = vmatpush1.msra.mxu0 %v131
    %1959 = vmatprep.subr.mxu0 %v128
    %1960 = vmatpush1.msra.mxu0 %v127
    %1961 = vmatprep.subr.mxu0 %v124
    %1962 = vmatpush1.msra.mxu0 %v123
    %1963 = vmatprep.subr.mxu0 %v120
    %1964 = vmatpush1.msra.mxu0 %v119
    %1965 = vmatprep.subr.mxu0 %v116
    %1966 = vmatpush1.msra.mxu0 %v115
    %1967 = vmatprep.subr.mxu0 %v112
    %1968 = vmatpush1.msra.mxu0 %v111
    %1969 = vmatprep.subr.mxu0 0.0
    %1970 = vmatpush2.msra.mxu0 0.0
    %1971 = vmatprep.subr.mxu0 0.0
    %1972 = vmatpush2.msra.mxu0 0.0
    %1973 = vmatprep.subr.mxu0 0.0
    %1974 = vmatpush2.msra.mxu0 0.0
    %1975 = vmatprep.subr.mxu0 0.0
    %1976 = vmatpush2.msra.mxu0 0.0
    %1977 = vmatprep.subr.mxu0 0.0
    %1978 = vmatpush2.msra.mxu0 0.0
    %1979 = vmatprep.subr.mxu0 0.0
    %1980 = vmatpush2.msra.mxu0 0.0
    %1981 = vmatprep.subr.mxu0 0.0
    %1982 = vmatpush2.msra.mxu0 0.0
    %1983 = vmatprep.subr.mxu0 0.0
    %1984 = vmatpush2.msra.mxu0 0.0
    %1985 = vmatprep.subr.mxu0 0.0
    %1986 = vmatpush2.msra.mxu0 0.0
    %1987 = vmatprep.subr.mxu0 0.0
    %1988 = vmatpush2.msra.mxu0 0.0
    %1989 = vmatprep.subr.mxu0 0.0
    %1990 = vmatpush2.msra.mxu0 0.0
    %1991 = vmatprep.subr.mxu0 0.0
    %1992 = vmatpush2.msra.mxu0 0.0
    %1993 = vmatprep.subr.mxu0 0.0
    %1994 = vmatpush2.msra.mxu0 0.0
    %1995 = vmatprep.subr.mxu0 0.0
    %1996 = vmatpush2.msra.mxu0 0.0
    %1997 = vmatprep.subr.mxu0 0.0
    %1998 = vmatpush2.msra.mxu0 0.0
    %1999 = vmatprep.subr.mxu0 0.0
    %2000 = vmatpush2.msra.mxu0 0.0
    %2001 = vmatprep.mubr.f32.mxu0 0.0
    %2002 = vmatmul.mubr.f32.gmra.mxu0 %v1864
    %v2003 = vpop.f32.mrf.mxu0
    %v2004 = vadd.f32 0.0, %v2003
    %v2005 = vpop.f32.mrf.mxu0
    %v2006 = vadd.f32 0.0, %v2005
    %2007 = vdwg.mxu0
    %v2012 = vcombine.low %v1933, %v1935
    %v2013 = vcombine.low %v2004, %v2006
    %v2015 = vunpack.c.l.s4 1966171168
    %v2016 = vunpack.c.0.s8 %v2015
    %v2017 = vlaneseq
    %v2018 = vshrl.u32 %v2017, 7
    %v2019 = vsub.s32 %v2016, %v2018
    %v2020 = vrot.slane %v2012, %v2019
    %v2022 = vunpack.c.l.s4 1966171168
    %v2023 = vunpack.c.0.s8 %v2022
    %v2024 = vlaneseq
    %v2025 = vshrl.u32 %v2024, 7
    %v2026 = vsub.s32 %v2023, %v2025
    %v2027 = vrot.slane %v2013, %v2026
    %v2028 = vcombine.low %v2020, %v2027
    %v2029 = vcombine.high %v2020, %v2027
    %v2031 = vunpack.c.l.s4 1966171168
    %v2032 = vunpack.c.0.s8 %v2031
    %v2033 = vlaneseq
    %v2034 = vshrl.u32 %v2033, 7
    %v2035 = vsub.s32 %v2032, %v2034
    %v2036 = vrot.slane %v2028, %v2035
    %v2038 = vunpack.c.l.s4 1966171168
    %v2039 = vunpack.c.0.s8 %v2038
    %v2040 = vlaneseq
    %v2041 = vshrl.u32 %v2040, 7
    %v2042 = vsub.s32 %v2039, %v2041
    %v2043 = vrot.slane %v2029, %v2042
    %v2046 = vadd.f32 %v1845, %v2036
    %v2047 = vadd.f32 %v1847, %v2043
    %v2048 = vxor.u32 %v2046, 2147483648
    %v2049 = vxor.u32 %v2047, 2147483648
    %v2050 = vmul.f32 %v2048, 1.442695
    %v2051 = vpow.pop %v2050
    %v2052 = vmul.f32 %v2049, 1.442695
    %v2053 = vpow.pop %v2052
    %v2054 = vadd.f32 %v2051, 1.0
    %v2055 = vadd.f32 %v2053, 1.0
    %v2056 = vrcp.pop %v2054
    %v2057 = vmul.f32 1.0, %v2056
    %v2058 = vrcp.pop %v2055
    %v2059 = vmul.f32 1.0, %v2058
    %v2062 = vrot.slane %v2046, 2
    %v2063 = vrot.slane %v2047, 2
    %v2066 = vtanh.pop %v2062
    %v2067 = vtanh.pop %v2063
    %v2070 = vrot.slane %v2057, 1
    %v2071 = vrot.slane %v2059, 1
    %v2074 = vmul.f32 %v2070, %v1834
    %v2075 = vmul.f32 %v2071, %v1835
    %v2076 = vmul.f32 %v2057, %v2066
    %v2077 = vmul.f32 %v2059, %v2067
    %v2078 = vadd.f32 %v2074, %v2076
    %v2079 = vadd.f32 %v2075, %v2077
    %v2080 = vtanh.pop %v2078
    %v2081 = vtanh.pop %v2079
    %v2082 = vrot.slane %v2057, 3
    %v2083 = vrot.slane %v2059, 3
    %v2086 = vmul.f32 %v2082, %v2080
    %v2087 = vmul.f32 %v2083, %v2081
    %s2088 = scalar_lea.vmem [#allocation2], 7
    %v2089 = vld [vmem:[%s2088] ss:$8 sm:$0xf]
    %s2090 = scalar_lea.vmem [#allocation2], 39
    %v2091 = vld [vmem:[%s2090] ss:$8 sm:$0xf]
    %v2094 = vcombine.low %v2086, %v2087
    %v2096 = vunpack.c.l.s4 1966171168
    %v2097 = vunpack.c.0.s8 %v2096
    %v2098 = vlaneseq
    %v2099 = vshrl.u32 %v2098, 7
    %v2100 = vsub.s32 %v2097, %v2099
    %v2101 = vrot.slane %v2094, %v2100
    %v2103 = vunpack.c.l.s4 1966171168
    %v2104 = vunpack.c.0.s8 %v2103
    %v2105 = vlaneseq
    %v2106 = vshrl.u32 %v2105, 7
    %v2107 = vsub.s32 %v2104, %v2106
    %v2108 = vrot.slane %v2101, %v2107
    %2110 = vmatprep.subr.mxu0 %v170
    %2111 = vmatpush1.msra.mxu0 %v169
    %2112 = vmatprep.subr.mxu0 %v166
    %2113 = vmatpush1.msra.mxu0 %v165
    %2114 = vmatprep.subr.mxu0 %v162
    %2115 = vmatpush1.msra.mxu0 %v161
    %2116 = vmatprep.subr.mxu0 %v158
    %2117 = vmatpush1.msra.mxu0 %v157
    %2118 = vmatprep.subr.mxu0 %v154
    %2119 = vmatpush1.msra.mxu0 %v153
    %2120 = vmatprep.subr.mxu0 %v150
    %2121 = vmatpush1.msra.mxu0 %v149
    %2122 = vmatprep.subr.mxu0 %v146
    %2123 = vmatpush1.msra.mxu0 %v145
    %2124 = vmatprep.subr.mxu0 %v142
    %2125 = vmatpush1.msra.mxu0 %v141
    %2126 = vmatprep.subr.mxu0 %v138
    %2127 = vmatpush1.msra.mxu0 %v137
    %2128 = vmatprep.subr.mxu0 %v134
    %2129 = vmatpush1.msra.mxu0 %v133
    %2130 = vmatprep.subr.mxu0 %v130
    %2131 = vmatpush1.msra.mxu0 %v129
    %2132 = vmatprep.subr.mxu0 %v126
    %2133 = vmatpush1.msra.mxu0 %v125
    %2134 = vmatprep.subr.mxu0 %v122
    %2135 = vmatpush1.msra.mxu0 %v121
    %2136 = vmatprep.subr.mxu0 %v118
    %2137 = vmatpush1.msra.mxu0 %v117
    %2138 = vmatprep.subr.mxu0 %v114
    %2139 = vmatpush1.msra.mxu0 %v113
    %2140 = vmatprep.subr.mxu0 %v110
    %2141 = vmatpush1.msra.mxu0 %v109
    %2142 = vmatprep.subr.mxu0 0.0
    %2143 = vmatpush2.msra.mxu0 0.0
    %2144 = vmatprep.subr.mxu0 0.0
    %2145 = vmatpush2.msra.mxu0 0.0
    %2146 = vmatprep.subr.mxu0 0.0
    %2147 = vmatpush2.msra.mxu0 0.0
    %2148 = vmatprep.subr.mxu0 0.0
    %2149 = vmatpush2.msra.mxu0 0.0
    %2150 = vmatprep.subr.mxu0 0.0
    %2151 = vmatpush2.msra.mxu0 0.0
    %2152 = vmatprep.subr.mxu0 0.0
    %2153 = vmatpush2.msra.mxu0 0.0
    %2154 = vmatprep.subr.mxu0 0.0
    %2155 = vmatpush2.msra.mxu0 0.0
    %2156 = vmatprep.subr.mxu0 0.0
    %2157 = vmatpush2.msra.mxu0 0.0
    %2158 = vmatprep.subr.mxu0 0.0
    %2159 = vmatpush2.msra.mxu0 0.0
    %2160 = vmatprep.subr.mxu0 0.0
    %2161 = vmatpush2.msra.mxu0 0.0
    %2162 = vmatprep.subr.mxu0 0.0
    %2163 = vmatpush2.msra.mxu0 0.0
    %2164 = vmatprep.subr.mxu0 0.0
    %2165 = vmatpush2.msra.mxu0 0.0
    %2166 = vmatprep.subr.mxu0 0.0
    %2167 = vmatpush2.msra.mxu0 0.0
    %2168 = vmatprep.subr.mxu0 0.0
    %2169 = vmatpush2.msra.mxu0 0.0
    %2170 = vmatprep.subr.mxu0 0.0
    %2171 = vmatpush2.msra.mxu0 0.0
    %2172 = vmatprep.subr.mxu0 0.0
    %2173 = vmatpush2.msra.mxu0 0.0
    %2174 = vmatprep.mubr.f32.mxu0 0.0
    %2175 = vmatmul.mubr.f32.gmra.mxu0 %v2108
    %v2176 = vpop.f32.mrf.mxu0
    %v2177 = vadd.f32 0.0, %v2176
    %v2178 = vpop.f32.mrf.mxu0
    %v2179 = vadd.f32 0.0, %v2178
    %2180 = vdwg.mxu0
    %2181 = vmatprep.subr.mxu0 %v172
    %2182 = vmatpush1.msra.mxu0 %v171
    %2183 = vmatprep.subr.mxu0 %v168
    %2184 = vmatpush1.msra.mxu0 %v167
    %2185 = vmatprep.subr.mxu0 %v164
    %2186 = vmatpush1.msra.mxu0 %v163
    %2187 = vmatprep.subr.mxu0 %v160
    %2188 = vmatpush1.msra.mxu0 %v159
    %2189 = vmatprep.subr.mxu0 %v156
    %2190 = vmatpush1.msra.mxu0 %v155
    %2191 = vmatprep.subr.mxu0 %v152
    %2192 = vmatpush1.msra.mxu0 %v151
    %2193 = vmatprep.subr.mxu0 %v148
    %2194 = vmatpush1.msra.mxu0 %v147
    %2195 = vmatprep.subr.mxu0 %v144
    %2196 = vmatpush1.msra.mxu0 %v143
    %2197 = vmatprep.subr.mxu0 %v140
    %2198 = vmatpush1.msra.mxu0 %v139
    %2199 = vmatprep.subr.mxu0 %v136
    %2200 = vmatpush1.msra.mxu0 %v135
    %2201 = vmatprep.subr.mxu0 %v132
    %2202 = vmatpush1.msra.mxu0 %v131
    %2203 = vmatprep.subr.mxu0 %v128
    %2204 = vmatpush1.msra.mxu0 %v127
    %2205 = vmatprep.subr.mxu0 %v124
    %2206 = vmatpush1.msra.mxu0 %v123
    %2207 = vmatprep.subr.mxu0 %v120
    %2208 = vmatpush1.msra.mxu0 %v119
    %2209 = vmatprep.subr.mxu0 %v116
    %2210 = vmatpush1.msra.mxu0 %v115
    %2211 = vmatprep.subr.mxu0 %v112
    %2212 = vmatpush1.msra.mxu0 %v111
    %2213 = vmatprep.subr.mxu0 0.0
    %2214 = vmatpush2.msra.mxu0 0.0
    %2215 = vmatprep.subr.mxu0 0.0
    %2216 = vmatpush2.msra.mxu0 0.0
    %2217 = vmatprep.subr.mxu0 0.0
    %2218 = vmatpush2.msra.mxu0 0.0
    %2219 = vmatprep.subr.mxu0 0.0
    %2220 = vmatpush2.msra.mxu0 0.0
    %2221 = vmatprep.subr.mxu0 0.0
    %2222 = vmatpush2.msra.mxu0 0.0
    %2223 = vmatprep.subr.mxu0 0.0
    %2224 = vmatpush2.msra.mxu0 0.0
    %2225 = vmatprep.subr.mxu0 0.0
    %2226 = vmatpush2.msra.mxu0 0.0
    %2227 = vmatprep.subr.mxu0 0.0
    %2228 = vmatpush2.msra.mxu0 0.0
    %2229 = vmatprep.subr.mxu0 0.0
    %2230 = vmatpush2.msra.mxu0 0.0
    %2231 = vmatprep.subr.mxu0 0.0
    %2232 = vmatpush2.msra.mxu0 0.0
    %2233 = vmatprep.subr.mxu0 0.0
    %2234 = vmatpush2.msra.mxu0 0.0
    %2235 = vmatprep.subr.mxu0 0.0
    %2236 = vmatpush2.msra.mxu0 0.0
    %2237 = vmatprep.subr.mxu0 0.0
    %2238 = vmatpush2.msra.mxu0 0.0
    %2239 = vmatprep.subr.mxu0 0.0
    %2240 = vmatpush2.msra.mxu0 0.0
    %2241 = vmatprep.subr.mxu0 0.0
    %2242 = vmatpush2.msra.mxu0 0.0
    %2243 = vmatprep.subr.mxu0 0.0
    %2244 = vmatpush2.msra.mxu0 0.0
    %2245 = vmatprep.mubr.f32.mxu0 0.0
    %2246 = vmatmul.mubr.f32.gmra.mxu0 %v2108
    %v2247 = vpop.f32.mrf.mxu0
    %v2248 = vadd.f32 0.0, %v2247
    %v2249 = vpop.f32.mrf.mxu0
    %v2250 = vadd.f32 0.0, %v2249
    %2251 = vdwg.mxu0
    %v2256 = vcombine.low %v2177, %v2179
    %v2257 = vcombine.low %v2248, %v2250
    %v2259 = vunpack.c.l.s4 1966171168
    %v2260 = vunpack.c.0.s8 %v2259
    %v2261 = vlaneseq
    %v2262 = vshrl.u32 %v2261, 7
    %v2263 = vsub.s32 %v2260, %v2262
    %v2264 = vrot.slane %v2256, %v2263
    %v2266 = vunpack.c.l.s4 1966171168
    %v2267 = vunpack.c.0.s8 %v2266
    %v2268 = vlaneseq
    %v2269 = vshrl.u32 %v2268, 7
    %v2270 = vsub.s32 %v2267, %v2269
    %v2271 = vrot.slane %v2257, %v2270
    %v2272 = vcombine.low %v2264, %v2271
    %v2273 = vcombine.high %v2264, %v2271
    %v2275 = vunpack.c.l.s4 1966171168
    %v2276 = vunpack.c.0.s8 %v2275
    %v2277 = vlaneseq
    %v2278 = vshrl.u32 %v2277, 7
    %v2279 = vsub.s32 %v2276, %v2278
    %v2280 = vrot.slane %v2272, %v2279
    %v2282 = vunpack.c.l.s4 1966171168
    %v2283 = vunpack.c.0.s8 %v2282
    %v2284 = vlaneseq
    %v2285 = vshrl.u32 %v2284, 7
    %v2286 = vsub.s32 %v2283, %v2285
    %v2287 = vrot.slane %v2273, %v2286
    %v2290 = vadd.f32 %v2089, %v2280
    %v2291 = vadd.f32 %v2091, %v2287
    %v2292 = vxor.u32 %v2290, 2147483648
    %v2293 = vxor.u32 %v2291, 2147483648
    %v2294 = vmul.f32 %v2292, 1.442695
    %v2295 = vpow.pop %v2294
    %v2296 = vmul.f32 %v2293, 1.442695
    %v2297 = vpow.pop %v2296
    %v2298 = vadd.f32 %v2295, 1.0
    %v2299 = vadd.f32 %v2297, 1.0
    %v2300 = vrcp.pop %v2298
    %v2301 = vmul.f32 1.0, %v2300
    %v2302 = vrcp.pop %v2299
    %v2303 = vmul.f32 1.0, %v2302
    %v2306 = vrot.slane %v2290, 2
    %v2307 = vrot.slane %v2291, 2
    %v2310 = vtanh.pop %v2306
    %v2311 = vtanh.pop %v2307
    %v2314 = vrot.slane %v2301, 1
    %v2315 = vrot.slane %v2303, 1
    %v2318 = vmul.f32 %v2314, %v2078
    %v2319 = vmul.f32 %v2315, %v2079
    %v2320 = vmul.f32 %v2301, %v2310
    %v2321 = vmul.f32 %v2303, %v2311
    %v2322 = vadd.f32 %v2318, %v2320
    %v2323 = vadd.f32 %v2319, %v2321
    %v2324 = vtanh.pop %v2322
    %v2325 = vtanh.pop %v2323
    %v2326 = vrot.slane %v2301, 3
    %v2327 = vrot.slane %v2303, 3
    %v2330 = vmul.f32 %v2326, %v2324
    %v2331 = vmul.f32 %v2327, %v2325
    %v2332 = vmax.f32 %v2330, 0.0
    %v2333 = vmax.f32 %v2331, 0.0
    %v2334 = vld [vmem:[#allocation8] sm:$0xff]
    %v2335 = vld [vmem:[#allocation8 + $0x8] sm:$0xff]
    %v2336 = vld [vmem:[#allocation8 + $0x10] sm:$0xff]
    %v2337 = vld [vmem:[#allocation8 + $0x18] sm:$0xff]
    %v2338 = vld [vmem:[#allocation8 + $0x20] sm:$0xff]
    %v2339 = vld [vmem:[#allocation8 + $0x28] sm:$0xff]
    %v2340 = vld [vmem:[#allocation8 + $0x30] sm:$0xff]
    %v2341 = vld [vmem:[#allocation8 + $0x38] sm:$0xff]
    %v2342 = vld [vmem:[#allocation8 + $0x40] sm:$0xff]
    %v2343 = vld [vmem:[#allocation8 + $0x48] sm:$0xff]
    %v2344 = vld [vmem:[#allocation8 + $0x50] sm:$0xff]
    %v2345 = vld [vmem:[#allocation8 + $0x58] sm:$0xff]
    %v2346 = vld [vmem:[#allocation8 + $0x60] sm:$0xff]
    %v2347 = vld [vmem:[#allocation8 + $0x68] sm:$0xff]
    %v2348 = vld [vmem:[#allocation8 + $0x70] sm:$0xff]
    %v2349 = vld [vmem:[#allocation8 + $0x78] sm:$0xff]
    %v2350 = vld [vmem:[%s5] sm:$0x1]
    %v2352 = vlaneseq
    %v2353 = vshrl.u32 %v2352, 7
    %v2354 = vsub.s32 0, %v2353
    %v2355 = vrot.slane %v2350, %v2354
    %v2359 = vcombine.low %v2332, %v2333
    %v2361 = vunpack.c.l.s4 1966171168
    %v2362 = vunpack.c.0.s8 %v2361
    %v2363 = vlaneseq
    %v2364 = vshrl.u32 %v2363, 7
    %v2365 = vsub.s32 %v2362, %v2364
    %v2366 = vrot.slane %v2359, %v2365
    %v2368 = vunpack.c.l.s4 1966171168
    %v2369 = vunpack.c.0.s8 %v2368
    %v2370 = vlaneseq
    %v2371 = vshrl.u32 %v2370, 7
    %v2372 = vsub.s32 %v2369, %v2371
    %v2373 = vrot.slane %v2366, %v2372
    %2375 = vmatprep.subr.mxu0 0.0
    %2376 = vmatpush1.msra.mxu0 %v2349
    %2377 = vmatprep.subr.mxu0 0.0
    %2378 = vmatpush1.msra.mxu0 %v2348
    %2379 = vmatprep.subr.mxu0 0.0
    %2380 = vmatpush1.msra.mxu0 %v2347
    %2381 = vmatprep.subr.mxu0 0.0
    %2382 = vmatpush1.msra.mxu0 %v2346
    %2383 = vmatprep.subr.mxu0 0.0
    %2384 = vmatpush1.msra.mxu0 %v2345
    %2385 = vmatprep.subr.mxu0 0.0
    %2386 = vmatpush1.msra.mxu0 %v2344
    %2387 = vmatprep.subr.mxu0 0.0
    %2388 = vmatpush1.msra.mxu0 %v2343
    %2389 = vmatprep.subr.mxu0 0.0
    %2390 = vmatpush1.msra.mxu0 %v2342
    %2391 = vmatprep.subr.mxu0 0.0
    %2392 = vmatpush1.msra.mxu0 %v2341
    %2393 = vmatprep.subr.mxu0 0.0
    %2394 = vmatpush1.msra.mxu0 %v2340
    %2395 = vmatprep.subr.mxu0 0.0
    %2396 = vmatpush1.msra.mxu0 %v2339
    %2397 = vmatprep.subr.mxu0 0.0
    %2398 = vmatpush1.msra.mxu0 %v2338
    %2399 = vmatprep.subr.mxu0 0.0
    %2400 = vmatpush1.msra.mxu0 %v2337
    %2401 = vmatprep.subr.mxu0 0.0
    %2402 = vmatpush1.msra.mxu0 %v2336
    %2403 = vmatprep.subr.mxu0 0.0
    %2404 = vmatpush1.msra.mxu0 %v2335
    %2405 = vmatprep.subr.mxu0 0.0
    %2406 = vmatpush1.msra.mxu0 %v2334
    %2407 = vmatprep.subr.mxu0 0.0
    %2408 = vmatpush2.msra.mxu0 0.0
    %2409 = vmatprep.subr.mxu0 0.0
    %2410 = vmatpush2.msra.mxu0 0.0
    %2411 = vmatprep.subr.mxu0 0.0
    %2412 = vmatpush2.msra.mxu0 0.0
    %2413 = vmatprep.subr.mxu0 0.0
    %2414 = vmatpush2.msra.mxu0 0.0
    %2415 = vmatprep.subr.mxu0 0.0
    %2416 = vmatpush2.msra.mxu0 0.0
    %2417 = vmatprep.subr.mxu0 0.0
    %2418 = vmatpush2.msra.mxu0 0.0
    %2419 = vmatprep.subr.mxu0 0.0
    %2420 = vmatpush2.msra.mxu0 0.0
    %2421 = vmatprep.subr.mxu0 0.0
    %2422 = vmatpush2.msra.mxu0 0.0
    %2423 = vmatprep.subr.mxu0 0.0
    %2424 = vmatpush2.msra.mxu0 0.0
    %2425 = vmatprep.subr.mxu0 0.0
    %2426 = vmatpush2.msra.mxu0 0.0
    %2427 = vmatprep.subr.mxu0 0.0
    %2428 = vmatpush2.msra.mxu0 0.0
    %2429 = vmatprep.subr.mxu0 0.0
    %2430 = vmatpush2.msra.mxu0 0.0
    %2431 = vmatprep.subr.mxu0 0.0
    %2432 = vmatpush2.msra.mxu0 0.0
    %2433 = vmatprep.subr.mxu0 0.0
    %2434 = vmatpush2.msra.mxu0 0.0
    %2435 = vmatprep.subr.mxu0 0.0
    %2436 = vmatpush2.msra.mxu0 0.0
    %2437 = vmatprep.subr.mxu0 0.0
    %2438 = vmatpush2.msra.mxu0 0.0
    %2439 = vmatprep.mubr.f32.mxu0 0.0
    %2440 = vmatmul.mubr.f32.gmra.mxu0 %v2373
    %v2441 = vpop.f32.mrf.mxu0
    %v2442 = vadd.f32 %v2355, %v2441
    %v2443 = vpop.f32.mrf.mxu0
    %2444 = vdwg.mxu0
    %v2445 = vmax.f32 %v2442, 0.0
    %v2446 = vld [vmem:[#allocation10] sm:$0xff]
    %v2447 = vld [vmem:[#allocation10 + $0x8] sm:$0xff]
    %v2448 = vld [vmem:[#allocation10 + $0x10] sm:$0xff]
    %v2449 = vld [vmem:[#allocation10 + $0x18] sm:$0xff]
    %v2450 = vld [vmem:[#allocation10 + $0x20] sm:$0xff]
    %v2451 = vld [vmem:[#allocation10 + $0x28] sm:$0xff]
    %v2452 = vld [vmem:[#allocation10 + $0x30] sm:$0xff]
    %v2453 = vld [vmem:[#allocation10 + $0x38] sm:$0xff]
    %v2454 = vld [vmem:[#allocation10 + $0x40] sm:$0xff]
    %v2455 = vld [vmem:[#allocation10 + $0x48] sm:$0xff]
    %v2456 = vld [vmem:[#allocation10 + $0x50] sm:$0xff]
    %v2457 = vld [vmem:[#allocation10 + $0x58] sm:$0xff]
    %v2458 = vld [vmem:[#allocation10 + $0x60] sm:$0xff]
    %v2459 = vld [vmem:[#allocation10 + $0x68] sm:$0xff]
    %v2460 = vld [vmem:[#allocation10 + $0x70] sm:$0xff]
    %v2461 = vld [vmem:[#allocation10 + $0x78] sm:$0xff]
    %v2462 = vld [vmem:[#allocation11] sm:$0x1]
    %v2464 = vlaneseq
    %v2465 = vshrl.u32 %v2464, 7
    %v2466 = vsub.s32 0, %v2465
    %v2467 = vrot.slane %v2462, %v2466
    %2469 = vmatprep.subr.mxu0 0.0
    %2470 = vmatpush1.msra.mxu0 %v2461
    %2471 = vmatprep.subr.mxu0 0.0
    %2472 = vmatpush1.msra.mxu0 %v2460
    %2473 = vmatprep.subr.mxu0 0.0
    %2474 = vmatpush1.msra.mxu0 %v2459
    %2475 = vmatprep.subr.mxu0 0.0
    %2476 = vmatpush1.msra.mxu0 %v2458
    %2477 = vmatprep.subr.mxu0 0.0
    %2478 = vmatpush1.msra.mxu0 %v2457
    %2479 = vmatprep.subr.mxu0 0.0
    %2480 = vmatpush1.msra.mxu0 %v2456
    %2481 = vmatprep.subr.mxu0 0.0
    %2482 = vmatpush1.msra.mxu0 %v2455
    %2483 = vmatprep.subr.mxu0 0.0
    %2484 = vmatpush1.msra.mxu0 %v2454
    %2485 = vmatprep.subr.mxu0 0.0
    %2486 = vmatpush1.msra.mxu0 %v2453
    %2487 = vmatprep.subr.mxu0 0.0
    %2488 = vmatpush1.msra.mxu0 %v2452
    %2489 = vmatprep.subr.mxu0 0.0
    %2490 = vmatpush1.msra.mxu0 %v2451
    %2491 = vmatprep.subr.mxu0 0.0
    %2492 = vmatpush1.msra.mxu0 %v2450
    %2493 = vmatprep.subr.mxu0 0.0
    %2494 = vmatpush1.msra.mxu0 %v2449
    %2495 = vmatprep.subr.mxu0 0.0
    %2496 = vmatpush1.msra.mxu0 %v2448
    %2497 = vmatprep.subr.mxu0 0.0
    %2498 = vmatpush1.msra.mxu0 %v2447
    %2499 = vmatprep.subr.mxu0 0.0
    %2500 = vmatpush1.msra.mxu0 %v2446
    %2501 = vmatprep.subr.mxu0 0.0
    %2502 = vmatpush2.msra.mxu0 0.0
    %2503 = vmatprep.subr.mxu0 0.0
    %2504 = vmatpush2.msra.mxu0 0.0
    %2505 = vmatprep.subr.mxu0 0.0
    %2506 = vmatpush2.msra.mxu0 0.0
    %2507 = vmatprep.subr.mxu0 0.0
    %2508 = vmatpush2.msra.mxu0 0.0
    %2509 = vmatprep.subr.mxu0 0.0
    %2510 = vmatpush2.msra.mxu0 0.0
    %2511 = vmatprep.subr.mxu0 0.0
    %2512 = vmatpush2.msra.mxu0 0.0
    %2513 = vmatprep.subr.mxu0 0.0
    %2514 = vmatpush2.msra.mxu0 0.0
    %2515 = vmatprep.subr.mxu0 0.0
    %2516 = vmatpush2.msra.mxu0 0.0
    %2517 = vmatprep.subr.mxu0 0.0
    %2518 = vmatpush2.msra.mxu0 0.0
    %2519 = vmatprep.subr.mxu0 0.0
    %2520 = vmatpush2.msra.mxu0 0.0
    %2521 = vmatprep.subr.mxu0 0.0
    %2522 = vmatpush2.msra.mxu0 0.0
    %2523 = vmatprep.subr.mxu0 0.0
    %2524 = vmatpush2.msra.mxu0 0.0
    %2525 = vmatprep.subr.mxu0 0.0
    %2526 = vmatpush2.msra.mxu0 0.0
    %2527 = vmatprep.subr.mxu0 0.0
    %2528 = vmatpush2.msra.mxu0 0.0
    %2529 = vmatprep.subr.mxu0 0.0
    %2530 = vmatpush2.msra.mxu0 0.0
    %2531 = vmatprep.subr.mxu0 0.0
    %2532 = vmatpush2.msra.mxu0 0.0
    %2533 = vmatprep.mubr.f32.mxu0 0.0
    %2534 = vmatmul.mubr.f32.gmra.mxu0 %v2445
    %v2535 = vpop.f32.mrf.mxu0
    %v2536 = vadd.f32 %v2467, %v2535
    %v2537 = vpop.f32.mrf.mxu0
    %2538 = vdwg.mxu0
    %2539 = vst [vmem:[%s8] sm:$0x3] %v2536
    // Predicated region
    $region58: #{lstm1_forward.1} parent=1 // pred_check
      _
    $region59: #{lstm1_forward.1} parent=1 // pred_check_branch
      %2541 = sbr.rel (0) target = $region61
    $region60: #{lstm1_forward.1} parent=1 // pred_region
      _
    $region61: #{lstm1_forward.1} parent=1 // pred_fallthru
      _
    // Predicated region
    $region62: #{lstm1_forward.1} parent=1 // pred_check
      _
    $region63: #{lstm1_forward.1} parent=1 // pred_check_branch
      %2543 = sbr.rel (0) target = $region65
    $region64: #{lstm1_forward.1} parent=1 // pred_region
      _
    $region65: #{lstm1_forward.1} parent=1 // pred_fallthru
      _
    %2544 = vsyncpa [#allocation4], 1
    %2545 = vsyncpa [#allocation6], 1
    %2546 = vsyncpa [#allocation9], 1
    %2547 = vsyncpa [#allocation12], 1

</llo_original>
